<compile_context>
chip_gen: v5e
topology: v5e:2x2
jax: 0.10.0
libtpu: 0.0.40
codegen_flags: <defaults>
</compile_context>

<pallas_src>
import functools

import jax
import jax.numpy as jnp
from jax.experimental import pallas as pl
from jax.experimental.pallas import tpu as pltpu

BN_EPS = 1e-5


def _round_up(n, m):
    return ((n + m - 1) // m) * m


def _vmem_limit_bytes():
    """Generation-aware scoped-VMEM limit: 3/4 of physical capacity
    (128 MiB on v5e/v6e -> 96 MiB, 64 MiB on v7x -> 48 MiB)."""
    try:
        cap = int(pltpu.get_tpu_info().vmem_capacity_bytes)
    except Exception:
        cap = 64 << 20
    return (cap * 3) // 4


def _user_embedding_kernel(
    x_ref,                                   # [Bp, D_in]  f32 (cast to bf16 in-kernel)
    w1_ref, b1_ref, g1_ref, be1_ref,         # bf16 / f32 / f32 / f32
    w2_ref, b2_ref, g2_ref, be2_ref,
    w3_ref, b3_ref,
    wc_ref, bc_ref,
    a_ref,                                   # SMEM (1,) f32 scalar PReLU slope
    emb_ref, out_ref,                        # [Bp, EMB_PAD], [Bp, NC_PAD]
    *, n_valid,                              # true (unpadded) batch size, static
):
    b_pad = x_ref.shape[0]
    inv_b = 1.0 / n_valid

    # Row mask for padded batch rows (static: compiled away when no padding).
    if n_valid != b_pad:
        row_ok = jax.lax.broadcasted_iota(jnp.int32, (b_pad, 1), 0) < n_valid
    else:
        row_ok = None

    def bn_stats(h):
        # Fused single pass: sum and sum-of-squares; biased variance (PyTorch norm).
        hm = h if row_ok is None else jnp.where(row_ok, h, 0.0)
        s = jnp.sum(hm, axis=0, keepdims=True)
        q = jnp.sum(hm * hm, axis=0, keepdims=True)
        mu = s * inv_b
        var = jnp.maximum(q * inv_b - mu * mu, 0.0)
        return mu, var

    # --- Linear(input_dim, 1024) + ReLU + BatchNorm1d(1024) (batch stats) ---
    x = x_ref[...].astype(jnp.bfloat16)      # in-kernel cast: VPU filler under MXU
    h1 = jnp.dot(x, w1_ref[...], preferred_element_type=jnp.float32) + b1_ref[...]
    h1 = jnp.maximum(h1, 0.0)
    mu1, var1 = bn_stats(h1)
    h1 = g1_ref[...] * (h1 - mu1) * jax.lax.rsqrt(var1 + BN_EPS) + be1_ref[...]

    # --- Linear(1024, 512) + ReLU + BatchNorm1d(512) ---
    h2 = jnp.dot(h1.astype(jnp.bfloat16), w2_ref[...],
                 preferred_element_type=jnp.float32) + b2_ref[...]
    h2 = jnp.maximum(h2, 0.0)
    mu2, var2 = bn_stats(h2)
    h2 = g2_ref[...] * (h2 - mu2) * jax.lax.rsqrt(var2 + BN_EPS) + be2_ref[...]

    # --- Linear(512, embedding_dim_padded) + PReLU (single shared slope) ---
    h3 = jnp.dot(h2.astype(jnp.bfloat16), w3_ref[...],
                 preferred_element_type=jnp.float32) + b3_ref[...]
    a = a_ref[0]                             # scalar read from SMEM
    emb = jnp.maximum(h3, 0.0) + a * jnp.minimum(h3, 0.0)
    emb_ref[...] = emb.astype(emb_ref.dtype)

    # --- classifier: Linear(embedding_dim_padded, num_classes_padded) ---
    out_ref[...] = (jnp.dot(emb.astype(jnp.bfloat16), wc_ref[...],
                            preferred_element_type=jnp.float32)
                    + bc_ref[...]).astype(out_ref.dtype)


def prepare_params(params):
    """One-time weight preprocessing (hoisted out of the per-call path).

    Pads the last two layers' output features up to multiples of 128 with zeros
    (lane-dense stores; padded columns are exactly zero and sliced off later) and
    casts all MXU weight operands to bf16 (f32 accumulation happens in-kernel).
    Call once and reuse the result across forward calls so weights stay resident.
    """
    emb_dim = int(params["w3"].shape[1])
    num_classes = int(params["wc"].shape[1])
    emb_pad = _round_up(emb_dim, 128)
    nc_pad = _round_up(num_classes, 128)

    w3 = jnp.pad(params["w3"], ((0, 0), (0, emb_pad - emb_dim)))
    b3 = jnp.pad(params["b3"], ((0, 0), (0, emb_pad - emb_dim)))
    wc = jnp.pad(params["wc"], ((0, emb_pad - emb_dim), (0, nc_pad - num_classes)))
    bc = jnp.pad(params["bc"], ((0, 0), (0, nc_pad - num_classes)))

    # Note: the first-layer contraction dim (input_dim) is left unpadded on purpose —
    # padding it would require a per-call pad of x, which costs more than it saves.
    return {
        "w1": params["w1"].astype(jnp.bfloat16), "b1": params["b1"],
        "g1": params["g1"], "be1": params["be1"],
        "w2": params["w2"].astype(jnp.bfloat16), "b2": params["b2"],
        "g2": params["g2"], "be2": params["be2"],
        "w3": w3.astype(jnp.bfloat16), "b3": b3,
        "wc": wc.astype(jnp.bfloat16), "bc": bc,
        "a": params["a"].reshape((1,)).astype(jnp.float32),
        "emb_dim": emb_dim, "num_classes": num_classes,
    }


def user_embedding_net(x, prepared):
    """x: [B, input_dim] float32. prepared: output of prepare_params(params)."""
    B, d_in = x.shape
    emb_dim = prepared["emb_dim"]
    num_classes = prepared["num_classes"]
    emb_pad = prepared["w3"].shape[1]
    nc_pad = prepared["wc"].shape[1]

    # Dense f32 sublanes: pad the batch to a multiple of 8. Padded rows are masked out
    # of the BN statistics in-kernel and sliced off the outputs, so results are exact.
    b_pad = _round_up(B, 8)
    x_in = x if b_pad == B else jnp.pad(x, ((0, b_pad - B), (0, 0)))

    vmem_limit = _vmem_limit_bytes()

    # Fail fast if the fused single-grid-point path cannot fit this batch in VMEM
    # (chip-dependent; avoids silent per-generation breakage).
    weight_bytes = sum(
        int(prepared[k].size) * prepared[k].dtype.itemsize
        for k in ("w1", "b1", "g1", "be1", "w2", "b2", "g2", "be2",
                  "w3", "b3", "wc", "bc", "a"))
    act_bytes = b_pad * (d_in + 1024 + 512 + emb_pad + nc_pad) * 4
    est_bytes = weight_bytes + 2 * act_bytes          # ~2x headroom for live temporaries
    if est_bytes > vmem_limit:
        raise ValueError(
            f"Batch {B} needs ~{est_bytes >> 20} MiB VMEM (> {vmem_limit >> 20} MiB "
            "limit on this chip) for the fused BatchNorm path; reduce the batch size. "
            "TODO(synk): batch-tiled two-phase BN path for very large batches.")

    args = (
        x_in,
        prepared["w1"], prepared["b1"], prepared["g1"], prepared["be1"],
        prepared["w2"], prepared["b2"], prepared["g2"], prepared["be2"],
        prepared["w3"], prepared["b3"],
        prepared["wc"], prepared["bc"],
        prepared["a"],
    )

    vmem = pl.BlockSpec(memory_space=pltpu.MemorySpace.VMEM)
    smem = pl.BlockSpec(memory_space=pltpu.MemorySpace.SMEM)
    in_specs = [vmem] * (len(args) - 1) + [smem]      # PReLU slope -> SMEM scalar

    flops = 2 * b_pad * (d_in * 1024 + 1024 * 512 + 512 * emb_pad + emb_pad * nc_pad)
    in_bytes = sum(int(v.size) * v.dtype.itemsize for v in args)
    out_bytes = b_pad * (emb_pad + nc_pad) * 4

    kernel = functools.partial(_user_embedding_kernel, n_valid=B)

    emb_p, out_p = pl.pallas_call(
        kernel,
        out_shape=(
            jax.ShapeDtypeStruct((b_pad, emb_pad), jnp.float32),
            jax.ShapeDtypeStruct((b_pad, nc_pad), jnp.float32),
        ),
        in_specs=in_specs,
        out_specs=(vmem, vmem),
        compiler_params=pltpu.CompilerParams(vmem_limit_bytes=vmem_limit),
        cost_estimate=pl.CostEstimate(
            flops=flops,
            transcendentals=1024 + 512,               # rsqrt per BN feature
            bytes_accessed=in_bytes + out_bytes,
        ),
    )(*args)

    return emb_p[:B, :emb_dim], out_p[:B, :num_classes]


def init_params(key, input_dim, embedding_dim, num_classes):
    """Deterministic init mirroring PyTorch defaults (uniform(-1/sqrt(in), 1/sqrt(in)))."""
    def linear(k, fan_in, fan_out):
        kw, kb = jax.random.split(k)
        bound = 1.0 / jnp.sqrt(jnp.float32(fan_in))
        w = jax.random.uniform(kw, (fan_in, fan_out), jnp.float32, -bound, bound)
        b = jax.random.uniform(kb, (1, fan_out), jnp.float32, -bound, bound)
        return w, b

    k1, k2, k3, kc = jax.random.split(key, 4)
    w1, b1 = linear(k1, input_dim, 1024)
    w2, b2 = linear(k2, 1024, 512)
    w3, b3 = linear(k3, 512, embedding_dim)
    wc, bc = linear(kc, embedding_dim, num_classes)
    return {
        "w1": w1, "b1": b1,
        "g1": jnp.ones((1, 1024), jnp.float32), "be1": jnp.zeros((1, 1024), jnp.float32),
        "w2": w2, "b2": b2,
        "g2": jnp.ones((1, 512), jnp.float32), "be2": jnp.zeros((1, 512), jnp.float32),
        "w3": w3, "b3": b3,
        "a": jnp.full((1,), 0.25, jnp.float32),   # nn.PReLU() default
        "wc": wc, "bc": bc,
    }


def _reference(x, p, dot_dtype=jnp.float32):
    """Pure-JAX reference. dot_dtype=bfloat16 mirrors the kernel's MXU operand precision."""
    def mm(a, w):
        return jnp.dot(a.astype(dot_dtype), w.astype(dot_dtype),
                       preferred_element_type=jnp.float32)

    h1 = jnp.maximum(mm(x, p["w1"]) + p["b1"], 0.0)
    mu1 = jnp.mean(h1, axis=0, keepdims=True)
    v1 = jnp.mean((h1 - mu1) ** 2, axis=0, keepdims=True)
    h1 = p["g1"] * (h1 - mu1) / jnp.sqrt(v1 + BN_EPS) + p["be1"]
    h2 = jnp.maximum(mm(h1, p["w2"]) + p["b2"], 0.0)
    mu2 = jnp.mean(h2, axis=0, keepdims=True)
    v2 = jnp.mean((h2 - mu2) ** 2, axis=0, keepdims=True)
    h2 = p["g2"] * (h2 - mu2) / jnp.sqrt(v2 + BN_EPS) + p["be2"]
    h3 = mm(h2, p["w3"]) + p["b3"]
    emb = jnp.maximum(h3, 0.0) + p["a"][0] * jnp.minimum(h3, 0.0)
    return emb, mm(emb, p["wc"]) + p["bc"]


if __name__ == "__main__":
    B, INPUT_DIM, EMB_DIM, NUM_CLASSES = 8, 32, 64, 16

    key = jax.random.PRNGKey(0)
    kx, kp = jax.random.split(key)
    x = jax.random.normal(kx, (B, INPUT_DIM), dtype=jnp.float32)
    params = init_params(kp, INPUT_DIM, EMB_DIM, NUM_CLASSES)
    prepared = prepare_params(params)        # one-time weight padding / bf16 cast

    emb, out = user_embedding_net(x, prepared)
    jax.block_until_ready((emb, out))
    assert emb.shape == (B, EMB_DIM) and out.shape == (B, NUM_CLASSES)

    # Matched-precision reference (bf16 dot operands, like the kernel): tight check.
    ref_emb, ref_out = _reference(x, params, dot_dtype=jnp.bfloat16)
    assert jnp.allclose(emb, ref_emb, atol=2e-2, rtol=2e-2)
    assert jnp.allclose(out, ref_out, atol=2e-2, rtol=2e-2)

    # Full-f32 reference: loose sanity check on the bf16-operand approximation.
    f32_emb, f32_out = _reference(x, params, dot_dtype=jnp.float32)
    assert jnp.allclose(emb, f32_emb, atol=1.5e-1, rtol=1.5e-1)
    assert jnp.allclose(out, f32_out, atol=1.5e-1, rtol=1.5e-1)

    # Non-multiple-of-8 batch: exercises the padded-row masking of the BN statistics.
    B2 = 5
    x2 = jax.random.normal(jax.random.PRNGKey(1), (B2, INPUT_DIM), dtype=jnp.float32)
    emb2, out2 = user_embedding_net(x2, prepared)
    jax.block_until_ready((emb2, out2))
    ref_emb2, ref_out2 = _reference(x2, params, dot_dtype=jnp.bfloat16)
    assert emb2.shape == (B2, EMB_DIM) and out2.shape == (B2, NUM_CLASSES)
    assert jnp.allclose(emb2, ref_emb2, atol=2e-2, rtol=2e-2)
    assert jnp.allclose(out2, ref_out2, atol=2e-2, rtol=2e-2)

    print("KERNEL_OK")
</pallas_src>

<mosaic_0001>
module attributes {stable_mosaic.version = 11 : i64} {
  func.func @_user_embedding_kernel(%arg0: memref<8x32xf32, #tpu.memory_space<vmem>>, %arg1: memref<32x1024xbf16, #tpu.memory_space<vmem>>, %arg2: memref<1x1024xf32, #tpu.memory_space<vmem>>, %arg3: memref<1x1024xf32, #tpu.memory_space<vmem>>, %arg4: memref<1x1024xf32, #tpu.memory_space<vmem>>, %arg5: memref<1024x512xbf16, #tpu.memory_space<vmem>>, %arg6: memref<1x512xf32, #tpu.memory_space<vmem>>, %arg7: memref<1x512xf32, #tpu.memory_space<vmem>>, %arg8: memref<1x512xf32, #tpu.memory_space<vmem>>, %arg9: memref<512x128xbf16, #tpu.memory_space<vmem>>, %arg10: memref<1x128xf32, #tpu.memory_space<vmem>>, %arg11: memref<128x128xbf16, #tpu.memory_space<vmem>>, %arg12: memref<1x128xf32, #tpu.memory_space<vmem>>, %arg13: memref<1xf32, #tpu.memory_space<smem>>, %arg14: memref<8x128xf32, #tpu.memory_space<vmem>>, %arg15: memref<8x128xf32, #tpu.memory_space<vmem>>) attributes {dimension_semantics = [], scalar_prefetch = 0 : i64, scratch_operands = 0 : i64, tpu.core_type = #tpu.core_type<tc>} {
    %c0 = arith.constant 0 : index
    %c0_0 = arith.constant 0 : index
    %0 = vector.load %arg0[%c0, %c0_0] : memref<8x32xf32, #tpu.memory_space<vmem>>, vector<8x32xf32>
    %1 = arith.truncf %0 : vector<8x32xf32> to vector<8x32xbf16>
    %c0_1 = arith.constant 0 : index
    %c0_2 = arith.constant 0 : index
    %2 = vector.load %arg1[%c0_1, %c0_2] : memref<32x1024xbf16, #tpu.memory_space<vmem>>, vector<32x1024xbf16>
    %cst = arith.constant dense<0.000000e+00> : vector<8x1024xf32>
    %3 = tpu.matmul %1, %2, %cst {dimension_numbers = #tpu.dot_dimension_numbers<[1], [0], [0], [1], [0, 0, 1, 1], [], []>} : vector<8x32xbf16>, vector<32x1024xbf16>, vector<8x1024xf32> -> vector<8x1024xf32>
    %c0_3 = arith.constant 0 : index
    %c0_4 = arith.constant 0 : index
    %4 = vector.load %arg2[%c0_3, %c0_4] : memref<1x1024xf32, #tpu.memory_space<vmem>>, vector<1x1024xf32>
    %5 = vector.broadcast %4 : vector<1x1024xf32> to vector<8x1024xf32>
    %6 = arith.addf %3, %5 : vector<8x1024xf32>
    %cst_5 = arith.constant 0.000000e+00 : f32
    %7 = vector.broadcast %cst_5 : f32 to vector<8x1024xf32>
    %8 = arith.maximumf %6, %7 : vector<8x1024xf32>
    %cst_6 = arith.constant dense<0.000000e+00> : vector<1024xf32>
    %9 = vector.multi_reduction <add>, %8, %cst_6 [0] : vector<8x1024xf32> to vector<1024xf32>
    %10 = vector.shape_cast %9 : vector<1024xf32> to vector<1x1024xf32>
    %11 = arith.mulf %8, %8 : vector<8x1024xf32>
    %cst_7 = arith.constant dense<0.000000e+00> : vector<1024xf32>
    %12 = vector.multi_reduction <add>, %11, %cst_7 [0] : vector<8x1024xf32> to vector<1024xf32>
    %13 = vector.shape_cast %12 : vector<1024xf32> to vector<1x1024xf32>
    %cst_8 = arith.constant 1.250000e-01 : f32
    %14 = vector.broadcast %cst_8 : f32 to vector<1x1024xf32>
    %15 = arith.mulf %10, %14 : vector<1x1024xf32>
    %cst_9 = arith.constant 1.250000e-01 : f32
    %16 = vector.broadcast %cst_9 : f32 to vector<1x1024xf32>
    %17 = arith.mulf %13, %16 : vector<1x1024xf32>
    %18 = arith.mulf %15, %15 : vector<1x1024xf32>
    %19 = arith.subf %17, %18 : vector<1x1024xf32>
    %cst_10 = arith.constant 0.000000e+00 : f32
    %20 = vector.broadcast %cst_10 : f32 to vector<1x1024xf32>
    %21 = arith.maximumf %19, %20 : vector<1x1024xf32>
    %c0_11 = arith.constant 0 : index
    %c0_12 = arith.constant 0 : index
    %22 = vector.load %arg3[%c0_11, %c0_12] : memref<1x1024xf32, #tpu.memory_space<vmem>>, vector<1x1024xf32>
    %23 = vector.broadcast %15 : vector<1x1024xf32> to vector<8x1024xf32>
    %24 = arith.subf %8, %23 : vector<8x1024xf32>
    %25 = vector.broadcast %22 : vector<1x1024xf32> to vector<8x1024xf32>
    %26 = arith.mulf %25, %24 : vector<8x1024xf32>
    %cst_13 = arith.constant 9.99999974E-6 : f32
    %27 = vector.broadcast %cst_13 : f32 to vector<1x1024xf32>
    %28 = arith.addf %21, %27 : vector<1x1024xf32>
    %29 = math.rsqrt %28 : vector<1x1024xf32>
    %30 = vector.broadcast %29 : vector<1x1024xf32> to vector<8x1024xf32>
    %31 = arith.mulf %26, %30 : vector<8x1024xf32>
    %c0_14 = arith.constant 0 : index
    %c0_15 = arith.constant 0 : index
    %32 = vector.load %arg4[%c0_14, %c0_15] : memref<1x1024xf32, #tpu.memory_space<vmem>>, vector<1x1024xf32>
    %33 = vector.broadcast %32 : vector<1x1024xf32> to vector<8x1024xf32>
    %34 = arith.addf %31, %33 : vector<8x1024xf32>
    %35 = arith.truncf %34 : vector<8x1024xf32> to vector<8x1024xbf16>
    %c0_16 = arith.constant 0 : index
    %c0_17 = arith.constant 0 : index
    %36 = vector.load %arg5[%c0_16, %c0_17] : memref<1024x512xbf16, #tpu.memory_space<vmem>>, vector<1024x512xbf16>
    %cst_18 = arith.constant dense<0.000000e+00> : vector<8x512xf32>
    %37 = tpu.matmul %35, %36, %cst_18 {dimension_numbers = #tpu.dot_dimension_numbers<[1], [0], [0], [1], [0, 0, 1, 1], [], []>} : vector<8x1024xbf16>, vector<1024x512xbf16>, vector<8x512xf32> -> vector<8x512xf32>
    %c0_19 = arith.constant 0 : index
    %c0_20 = arith.constant 0 : index
    %38 = vector.load %arg6[%c0_19, %c0_20] : memref<1x512xf32, #tpu.memory_space<vmem>>, vector<1x512xf32>
    %39 = vector.broadcast %38 : vector<1x512xf32> to vector<8x512xf32>
    %40 = arith.addf %37, %39 : vector<8x512xf32>
    %cst_21 = arith.constant 0.000000e+00 : f32
    %41 = vector.broadcast %cst_21 : f32 to vector<8x512xf32>
    %42 = arith.maximumf %40, %41 : vector<8x512xf32>
    %cst_22 = arith.constant dense<0.000000e+00> : vector<512xf32>
    %43 = vector.multi_reduction <add>, %42, %cst_22 [0] : vector<8x512xf32> to vector<512xf32>
    %44 = vector.shape_cast %43 : vector<512xf32> to vector<1x512xf32>
    %45 = arith.mulf %42, %42 : vector<8x512xf32>
    %cst_23 = arith.constant dense<0.000000e+00> : vector<512xf32>
    %46 = vector.multi_reduction <add>, %45, %cst_23 [0] : vector<8x512xf32> to vector<512xf32>
    %47 = vector.shape_cast %46 : vector<512xf32> to vector<1x512xf32>
    %cst_24 = arith.constant 1.250000e-01 : f32
    %48 = vector.broadcast %cst_24 : f32 to vector<1x512xf32>
    %49 = arith.mulf %44, %48 : vector<1x512xf32>
    %cst_25 = arith.constant 1.250000e-01 : f32
    %50 = vector.broadcast %cst_25 : f32 to vector<1x512xf32>
    %51 = arith.mulf %47, %50 : vector<1x512xf32>
    %52 = arith.mulf %49, %49 : vector<1x512xf32>
    %53 = arith.subf %51, %52 : vector<1x512xf32>
    %cst_26 = arith.constant 0.000000e+00 : f32
    %54 = vector.broadcast %cst_26 : f32 to vector<1x512xf32>
    %55 = arith.maximumf %53, %54 : vector<1x512xf32>
    %c0_27 = arith.constant 0 : index
    %c0_28 = arith.constant 0 : index
    %56 = vector.load %arg7[%c0_27, %c0_28] : memref<1x512xf32, #tpu.memory_space<vmem>>, vector<1x512xf32>
    %57 = vector.broadcast %49 : vector<1x512xf32> to vector<8x512xf32>
    %58 = arith.subf %42, %57 : vector<8x512xf32>
    %59 = vector.broadcast %56 : vector<1x512xf32> to vector<8x512xf32>
    %60 = arith.mulf %59, %58 : vector<8x512xf32>
    %cst_29 = arith.constant 9.99999974E-6 : f32
    %61 = vector.broadcast %cst_29 : f32 to vector<1x512xf32>
    %62 = arith.addf %55, %61 : vector<1x512xf32>
    %63 = math.rsqrt %62 : vector<1x512xf32>
    %64 = vector.broadcast %63 : vector<1x512xf32> to vector<8x512xf32>
    %65 = arith.mulf %60, %64 : vector<8x512xf32>
    %c0_30 = arith.constant 0 : index
    %c0_31 = arith.constant 0 : index
    %66 = vector.load %arg8[%c0_30, %c0_31] : memref<1x512xf32, #tpu.memory_space<vmem>>, vector<1x512xf32>
    %67 = vector.broadcast %66 : vector<1x512xf32> to vector<8x512xf32>
    %68 = arith.addf %65, %67 : vector<8x512xf32>
    %69 = arith.truncf %68 : vector<8x512xf32> to vector<8x512xbf16>
    %c0_32 = arith.constant 0 : index
    %c0_33 = arith.constant 0 : index
    %70 = vector.load %arg9[%c0_32, %c0_33] : memref<512x128xbf16, #tpu.memory_space<vmem>>, vector<512x128xbf16>
    %cst_34 = arith.constant dense<0.000000e+00> : vector<8x128xf32>
    %71 = tpu.matmul %69, %70, %cst_34 {dimension_numbers = #tpu.dot_dimension_numbers<[1], [0], [0], [1], [0, 0, 1, 1], [], []>} : vector<8x512xbf16>, vector<512x128xbf16>, vector<8x128xf32> -> vector<8x128xf32>
    %c0_35 = arith.constant 0 : index
    %c0_36 = arith.constant 0 : index
    %72 = vector.load %arg10[%c0_35, %c0_36] : memref<1x128xf32, #tpu.memory_space<vmem>>, vector<1x128xf32>
    %73 = vector.broadcast %72 : vector<1x128xf32> to vector<8x128xf32>
    %74 = arith.addf %71, %73 : vector<8x128xf32>
    %c0_37 = arith.constant 0 : index
    %75 = memref.load %arg13[%c0_37] : memref<1xf32, #tpu.memory_space<smem>>
    %cst_38 = arith.constant 0.000000e+00 : f32
    %76 = vector.broadcast %cst_38 : f32 to vector<8x128xf32>
    %77 = arith.maximumf %74, %76 : vector<8x128xf32>
    %cst_39 = arith.constant 0.000000e+00 : f32
    %78 = vector.broadcast %cst_39 : f32 to vector<8x128xf32>
    %79 = arith.minimumf %74, %78 : vector<8x128xf32>
    %80 = vector.broadcast %75 : f32 to vector<8x128xf32>
    %81 = arith.mulf %80, %79 : vector<8x128xf32>
    %82 = arith.addf %77, %81 : vector<8x128xf32>
    %c0_40 = arith.constant 0 : index
    %c0_41 = arith.constant 0 : index
    %83 = vector.load %arg14[%c0_40, %c0_41] : memref<8x128xf32, #tpu.memory_space<vmem>>, vector<8x128xf32>
    tpu.vector_store %arg14[%c0_40, %c0_41], %82 {strides = array<i32>} : memref<8x128xf32, #tpu.memory_space<vmem>>, vector<8x128xf32>,
    %84 = arith.truncf %82 : vector<8x128xf32> to vector<8x128xbf16>
    %c0_42 = arith.constant 0 : index
    %c0_43 = arith.constant 0 : index
    %85 = vector.load %arg11[%c0_42, %c0_43] : memref<128x128xbf16, #tpu.memory_space<vmem>>, vector<128x128xbf16>
    %cst_44 = arith.constant dense<0.000000e+00> : vector<8x128xf32>
    %86 = tpu.matmul %84, %85, %cst_44 {dimension_numbers = #tpu.dot_dimension_numbers<[1], [0], [0], [1], [0, 0, 1, 1], [], []>} : vector<8x128xbf16>, vector<128x128xbf16>, vector<8x128xf32> -> vector<8x128xf32>
    %c0_45 = arith.constant 0 : index
    %c0_46 = arith.constant 0 : index
    %87 = vector.load %arg12[%c0_45, %c0_46] : memref<1x128xf32, #tpu.memory_space<vmem>>, vector<1x128xf32>
    %88 = vector.broadcast %87 : vector<1x128xf32> to vector<8x128xf32>
    %89 = arith.addf %86, %88 : vector<8x128xf32>
    %c0_47 = arith.constant 0 : index
    %c0_48 = arith.constant 0 : index
    %90 = vector.load %arg15[%c0_47, %c0_48] : memref<8x128xf32, #tpu.memory_space<vmem>>, vector<8x128xf32>
    tpu.vector_store %arg15[%c0_47, %c0_48], %89 {strides = array<i32>} : memref<8x128xf32, #tpu.memory_space<vmem>>, vector<8x128xf32>,
    return
  }
}

</mosaic_0001>

<llo_original>
// kernel: tpu_custom_call.1
$region0: #{tpu_custom_call.1}
  #allocation0 [shape = 'u32[]', space=smem, size = 0x4, offset = 0x4, fixed_abs, tag = 'smem constant byte address 0x4 - core index']
  #allocation1 [shape = 'u32[72,128]{1,0:T(1,128)}', space=vmem, size = 0x9000, scoped, tag = 'internal scratch']
  #allocation2 [shape = 'f32[1]{0:T(128)S(6)}', space=smem, size = 0x200, scoped, tag = 'scoped memory for tpu_custom_call.1']
  %s0 = inlined_call_operand.hbm [shape: f32[8,32], index: 0, kind: input, shape index: {}]
  %s1 = inlined_call_operand.hbm [shape: bf16[32,1024], index: 1, kind: input, shape index: {}]
  %s2 = inlined_call_operand.hbm [shape: f32[1,1024], index: 2, kind: input, shape index: {}]
  %s3 = inlined_call_operand.hbm [shape: f32[1,1024], index: 3, kind: input, shape index: {}]
  %s4 = inlined_call_operand.hbm [shape: f32[1,1024], index: 4, kind: input, shape index: {}]
  %s5 = inlined_call_operand.hbm [shape: bf16[1024,512], index: 5, kind: input, shape index: {}]
  %s6 = inlined_call_operand.vmem [shape: f32[1,512], index: 6, kind: input, shape index: {}]
  %s7 = inlined_call_operand.vmem [shape: f32[1,512], index: 7, kind: input, shape index: {}]
  %s8 = inlined_call_operand.hbm [shape: f32[1,512], index: 8, kind: input, shape index: {}]
  %s9 = inlined_call_operand.hbm [shape: bf16[512,128], index: 9, kind: input, shape index: {}]
  %s10 = inlined_call_operand.vmem [shape: f32[1,128], index: 10, kind: input, shape index: {}]
  %s11 = inlined_call_operand.hbm [shape: bf16[128,128], index: 11, kind: input, shape index: {}]
  %s12 = inlined_call_operand.vmem [shape: f32[1,128], index: 12, kind: input, shape index: {}]
  %s13 = inlined_call_operand.<no memory space> [shape: f32[1], index: 13, kind: input, shape index: {}]
  %s14 = inlined_call_operand.hbm [shape: f32[8,128], index: 14, kind: output, shape index: {0}]
  %s15 = inlined_call_operand.hbm [shape: f32[8,128], index: 15, kind: output, shape index: {1}]
  %16 = xla_tuple %s14, %s15
  %s17 = sld [smem:[#allocation0]]
  $region110: #{tpu_custom_call.1} parent=0
    _
  %s19 = ssub.s32 1, %s17
  %s20 = scalar_select 0, %s19, %s17
  %21 = sst [smem:[#allocation2]] %s13
  $region1: #{tpu_custom_call.1} parent=0
    #allocation3 [shape = 'u8[4096]{0}', space=vmem, size = 0x1000, scoped, tag = 'input window, operand 0, single buffered']
    #allocation4 [shape = 's32[1]{0}', space=sflag, size = 0x4, scoped, tag = 'scoped memory for tpu_custom_call.1']
    #allocation5 [shape = 's32[1]{0}', space=sflag, size = 0x4, scoped, tag = 'scoped memory for tpu_custom_call.1']
    #allocation6 [shape = 'u8[65536]{0}', space=vmem, size = 0x10000, scoped, tag = 'input window, operand 1, single buffered']
    #allocation7 [shape = 's32[1]{0}', space=sflag, size = 0x4, scoped, tag = 'scoped memory for tpu_custom_call.1']
    #allocation8 [shape = 'u8[4096]{0}', space=vmem, size = 0x1000, scoped, tag = 'input window, operand 2, single buffered']
    #allocation9 [shape = 'u8[4096]{0}', space=vmem, size = 0x1000, scoped, tag = 'input window, operand 3, single buffered']
    #allocation10 [shape = 's32[1]{0}', space=sflag, size = 0x4, scoped, tag = 'scoped memory for tpu_custom_call.1']
    #allocation11 [shape = 'u8[4096]{0}', space=vmem, size = 0x1000, scoped, tag = 'input window, operand 4, single buffered']
    #allocation12 [shape = 'u8[1048576]{0}', space=vmem, size = 0x100000, scoped, tag = 'input window, operand 5, single buffered']
    #allocation13 [shape = 's32[1]{0}', space=sflag, size = 0x4, scoped, tag = 'scoped memory for tpu_custom_call.1']
    #allocation14 [shape = 'u8[2048]{0}', space=vmem, size = 0x800, scoped, tag = 'input window, operand 8, single buffered']
    #allocation15 [shape = 'u8[131072]{0}', space=vmem, size = 0x20000, scoped, tag = 'input window, operand 9, single buffered']
    #allocation16 [shape = 's32[1]{0}', space=sflag, size = 0x4, scoped, tag = 'scoped memory for tpu_custom_call.1']
    #allocation17 [shape = 'u8[32768]{0}', space=vmem, size = 0x8000, scoped, tag = 'input window, operand 11, single buffered']
    #allocation18 [shape = 'u8[4096]{0}', space=vmem, size = 0x1000, scoped, tag = 'output window, operand 0, single buffered']
    #allocation19 [shape = 'u8[4096]{0}', space=vmem, size = 0x1000, scoped, tag = 'output window, operand 1, single buffered']
    #allocation20 [shape = 's32[1]{0}', space=sflag, size = 0x4, scoped, tag = 'scoped memory for tpu_custom_call.1']
    %22 = vsyncpa [#allocation4], 0
    %23 = vsyncpa [#allocation7], 0
    %24 = vsyncpa [#allocation10], 0
    %25 = vsyncpa [#allocation13], 0
    %26 = vsyncpa [#allocation16], 0
    %27 = vsyncpa [#allocation5], 0
    %28 = vsyncpa [#allocation20], 0
    // Predicated region
    $region2: #{tpu_custom_call.1} parent=1 // pred_check
      _
    $region3: #{tpu_custom_call.1} parent=1 // pred_check_branch
      %30 = sbr.rel (0) target = $region5
    $region4: #{tpu_custom_call.1} parent=1 // pred_region
      %32 = vsyncadd [#allocation4], 0
      %s34 = sshll.u32 %s0, 4
      %s35 = int_to_ptr.hbm [resolvable:$true] %s34
      %s36 = sshll.u32 [#allocation3], 4
      %s37 = int_to_ptr.vmem [resolvable:$true] %s36
      %39 = dma.hbm_to_vmem [thread:$0]  %s35, 128, %s37, [#allocation4]
    $region5: #{tpu_custom_call.1} parent=1 // pred_fallthru
      _
    // Predicated region
    $region6: #{tpu_custom_call.1} parent=1 // pred_check
      _
    $region7: #{tpu_custom_call.1} parent=1 // pred_check_branch
      %41 = sbr.rel (0) target = $region9
    $region8: #{tpu_custom_call.1} parent=1 // pred_region
      %43 = vsyncadd [#allocation7], 0
      %s44 = sshll.u32 %s1, 4
      %s45 = int_to_ptr.hbm [resolvable:$true] %s44
      %s46 = sshll.u32 [#allocation6], 4
      %s47 = int_to_ptr.vmem [resolvable:$true] %s46
      %52 = dma.hbm_to_vmem [thread:$0]  %s45, 2048, %s47, [#allocation7], 512, 512, 32
    $region9: #{tpu_custom_call.1} parent=1 // pred_fallthru
      _
    // Predicated region
    $region10: #{tpu_custom_call.1} parent=1 // pred_check
      _
    $region11: #{tpu_custom_call.1} parent=1 // pred_check_branch
      %54 = sbr.rel (0) target = $region13
    $region12: #{tpu_custom_call.1} parent=1 // pred_region
      %56 = vsyncadd [#allocation7], 0
      %s58 = sshll.u32 %s2, 4
      %s59 = int_to_ptr.hbm [resolvable:$true] %s58
      %s60 = sshll.u32 [#allocation8], 4
      %s61 = int_to_ptr.vmem [resolvable:$true] %s60
      %63 = dma.hbm_to_vmem [thread:$0]  %s59, 128, %s61, [#allocation7]
    $region13: #{tpu_custom_call.1} parent=1 // pred_fallthru
      _
    // Predicated region
    $region14: #{tpu_custom_call.1} parent=1 // pred_check
      _
    $region15: #{tpu_custom_call.1} parent=1 // pred_check_branch
      %65 = sbr.rel (0) target = $region17
    $region16: #{tpu_custom_call.1} parent=1 // pred_region
      %67 = vsyncadd [#allocation10], 0
      %s69 = sshll.u32 %s3, 4
      %s70 = int_to_ptr.hbm [resolvable:$true] %s69
      %s71 = sshll.u32 [#allocation9], 4
      %s72 = int_to_ptr.vmem [resolvable:$true] %s71
      %74 = dma.hbm_to_vmem [thread:$0]  %s70, 128, %s72, [#allocation10]
    $region17: #{tpu_custom_call.1} parent=1 // pred_fallthru
      _
    // Predicated region
    $region18: #{tpu_custom_call.1} parent=1 // pred_check
      _
    $region19: #{tpu_custom_call.1} parent=1 // pred_check_branch
      %76 = sbr.rel (0) target = $region21
    $region20: #{tpu_custom_call.1} parent=1 // pred_region
      %78 = vsyncadd [#allocation10], 0
      %s80 = sshll.u32 %s4, 4
      %s81 = int_to_ptr.hbm [resolvable:$true] %s80
      %s82 = sshll.u32 [#allocation11], 4
      %s83 = int_to_ptr.vmem [resolvable:$true] %s82
      %85 = dma.hbm_to_vmem [thread:$0]  %s81, 128, %s83, [#allocation10]
    $region21: #{tpu_custom_call.1} parent=1 // pred_fallthru
      _
    // Predicated region
    $region22: #{tpu_custom_call.1} parent=1 // pred_check
      _
    $region23: #{tpu_custom_call.1} parent=1 // pred_check_branch
      %87 = sbr.rel (0) target = $region25
    $region24: #{tpu_custom_call.1} parent=1 // pred_region
      %89 = vsyncadd [#allocation13], 0
      %s90 = sshll.u32 %s5, 4
      %s91 = int_to_ptr.hbm [resolvable:$true] %s90
      %s92 = sshll.u32 [#allocation12], 4
      %s93 = int_to_ptr.vmem [resolvable:$true] %s92
      %98 = dma.hbm_to_vmem [thread:$0]  %s91, 32768, %s93, [#allocation13], 256, 256, 16
    $region25: #{tpu_custom_call.1} parent=1 // pred_fallthru
      _
    // Predicated region
    $region26: #{tpu_custom_call.1} parent=1 // pred_check
      _
    $region27: #{tpu_custom_call.1} parent=1 // pred_check_branch
      %100 = sbr.rel (0) target = $region29
    $region28: #{tpu_custom_call.1} parent=1 // pred_region
      _
    $region29: #{tpu_custom_call.1} parent=1 // pred_fallthru
      _
    // Predicated region
    $region30: #{tpu_custom_call.1} parent=1 // pred_check
      _
    $region31: #{tpu_custom_call.1} parent=1 // pred_check_branch
      %102 = sbr.rel (0) target = $region33
    $region32: #{tpu_custom_call.1} parent=1 // pred_region
      _
    $region33: #{tpu_custom_call.1} parent=1 // pred_fallthru
      _
    // Predicated region
    $region34: #{tpu_custom_call.1} parent=1 // pred_check
      _
    $region35: #{tpu_custom_call.1} parent=1 // pred_check_branch
      %104 = sbr.rel (0) target = $region37
    $region36: #{tpu_custom_call.1} parent=1 // pred_region
      %106 = vsyncadd [#allocation13], 0
      %s108 = sshll.u32 %s8, 4
      %s109 = int_to_ptr.hbm [resolvable:$true] %s108
      %s110 = sshll.u32 [#allocation14], 4
      %s111 = int_to_ptr.vmem [resolvable:$true] %s110
      %113 = dma.hbm_to_vmem [thread:$0]  %s109, 64, %s111, [#allocation13]
    $region37: #{tpu_custom_call.1} parent=1 // pred_fallthru
      _
    // Predicated region
    $region38: #{tpu_custom_call.1} parent=1 // pred_check
      _
    $region39: #{tpu_custom_call.1} parent=1 // pred_check_branch
      %115 = sbr.rel (0) target = $region41
    $region40: #{tpu_custom_call.1} parent=1 // pred_region
      %117 = vsyncadd [#allocation16], 0
      %s118 = sshll.u32 %s9, 4
      %s119 = int_to_ptr.hbm [resolvable:$true] %s118
      %s120 = sshll.u32 [#allocation15], 4
      %s121 = int_to_ptr.vmem [resolvable:$true] %s120
      %126 = dma.hbm_to_vmem [thread:$0]  %s119, 4096, %s121, [#allocation16], 64, 64, 4
    $region41: #{tpu_custom_call.1} parent=1 // pred_fallthru
      _
    // Predicated region
    $region42: #{tpu_custom_call.1} parent=1 // pred_check
      _
    $region43: #{tpu_custom_call.1} parent=1 // pred_check_branch
      %128 = sbr.rel (0) target = $region45
    $region44: #{tpu_custom_call.1} parent=1 // pred_region
      _
    $region45: #{tpu_custom_call.1} parent=1 // pred_fallthru
      _
    // Predicated region
    $region46: #{tpu_custom_call.1} parent=1 // pred_check
      _
    $region47: #{tpu_custom_call.1} parent=1 // pred_check_branch
      %130 = sbr.rel (0) target = $region49
    $region48: #{tpu_custom_call.1} parent=1 // pred_region
      %132 = vsyncadd [#allocation16], 0
      %s133 = sshll.u32 %s11, 4
      %s134 = int_to_ptr.hbm [resolvable:$true] %s133
      %s135 = sshll.u32 [#allocation17], 4
      %s136 = int_to_ptr.vmem [resolvable:$true] %s135
      %141 = dma.hbm_to_vmem [thread:$0]  %s134, 1024, %s136, [#allocation16], 64, 64, 4
    $region49: #{tpu_custom_call.1} parent=1 // pred_fallthru
      _
    // Predicated region
    $region50: #{tpu_custom_call.1} parent=1 // pred_check
      _
    $region51: #{tpu_custom_call.1} parent=1 // pred_check_branch
      %143 = sbr.rel (0) target = $region53
    $region52: #{tpu_custom_call.1} parent=1 // pred_region
      _
    $region53: #{tpu_custom_call.1} parent=1 // pred_fallthru
      _
    // Predicated region
    $region54: #{tpu_custom_call.1} parent=1 // pred_check
      _
    $region55: #{tpu_custom_call.1} parent=1 // pred_check_branch
      %145 = sbr.rel (0) target = $region57
    $region56: #{tpu_custom_call.1} parent=1 // pred_region
      _
    $region57: #{tpu_custom_call.1} parent=1 // pred_fallthru
      _
    // Predicated region
    $region58: #{tpu_custom_call.1} parent=1 // pred_check
      _
    $region59: #{tpu_custom_call.1} parent=1 // pred_check_branch
      %147 = sbr.rel (0) target = $region61
    $region60: #{tpu_custom_call.1} parent=1 // pred_region
      %149 = dma.done [#allocation4], 128
    $region61: #{tpu_custom_call.1} parent=1 // pred_fallthru
      _
    // Predicated region
    $region62: #{tpu_custom_call.1} parent=1 // pred_check
      _
    $region63: #{tpu_custom_call.1} parent=1 // pred_check_branch
      %151 = sbr.rel (0) target = $region65
    $region64: #{tpu_custom_call.1} parent=1 // pred_region
      %153 = dma.done [#allocation7], 2048
    $region65: #{tpu_custom_call.1} parent=1 // pred_fallthru
      _
    // Predicated region
    $region66: #{tpu_custom_call.1} parent=1 // pred_check
      _
    $region67: #{tpu_custom_call.1} parent=1 // pred_check_branch
      %155 = sbr.rel (0) target = $region69
    $region68: #{tpu_custom_call.1} parent=1 // pred_region
      %157 = dma.done [#allocation7], 128
    $region69: #{tpu_custom_call.1} parent=1 // pred_fallthru
      _
    // Predicated region
    $region70: #{tpu_custom_call.1} parent=1 // pred_check
      _
    $region71: #{tpu_custom_call.1} parent=1 // pred_check_branch
      %159 = sbr.rel (0) target = $region73
    $region72: #{tpu_custom_call.1} parent=1 // pred_region
      %161 = dma.done [#allocation10], 128
    $region73: #{tpu_custom_call.1} parent=1 // pred_fallthru
      _
    // Predicated region
    $region74: #{tpu_custom_call.1} parent=1 // pred_check
      _
    $region75: #{tpu_custom_call.1} parent=1 // pred_check_branch
      %163 = sbr.rel (0) target = $region77
    $region76: #{tpu_custom_call.1} parent=1 // pred_region
      %165 = dma.done [#allocation10], 128
    $region77: #{tpu_custom_call.1} parent=1 // pred_fallthru
      _
    // Predicated region
    $region78: #{tpu_custom_call.1} parent=1 // pred_check
      _
    $region79: #{tpu_custom_call.1} parent=1 // pred_check_branch
      %167 = sbr.rel (0) target = $region81
    $region80: #{tpu_custom_call.1} parent=1 // pred_region
      %169 = dma.done [#allocation13], 32768
    $region81: #{tpu_custom_call.1} parent=1 // pred_fallthru
      _
    // Predicated region
    $region82: #{tpu_custom_call.1} parent=1 // pred_check
      _
    $region83: #{tpu_custom_call.1} parent=1 // pred_check_branch
      %171 = sbr.rel (0) target = $region85
    $region84: #{tpu_custom_call.1} parent=1 // pred_region
      %173 = dma.done [#allocation13], 64
    $region85: #{tpu_custom_call.1} parent=1 // pred_fallthru
      _
    // Predicated region
    $region86: #{tpu_custom_call.1} parent=1 // pred_check
      _
    $region87: #{tpu_custom_call.1} parent=1 // pred_check_branch
      %175 = sbr.rel (0) target = $region89
    $region88: #{tpu_custom_call.1} parent=1 // pred_region
      %177 = dma.done [#allocation16], 4096
    $region89: #{tpu_custom_call.1} parent=1 // pred_fallthru
      _
    // Predicated region
    $region90: #{tpu_custom_call.1} parent=1 // pred_check
      _
    $region91: #{tpu_custom_call.1} parent=1 // pred_check_branch
      %179 = sbr.rel (0) target = $region93
    $region92: #{tpu_custom_call.1} parent=1 // pred_region
      %181 = dma.done [#allocation16], 1024
    $region93: #{tpu_custom_call.1} parent=1 // pred_fallthru
      _
    %v183 = vld [vmem:[#allocation3] sm:$0xff]
    %v184 = vpack.c.bf16 %v183, %v183
    %v185 = vld [vmem:[#allocation6] sm:$0xff]
    %v186 = vld [vmem:[#allocation6 + $0x8] sm:$0xff]
    %v187 = vld [vmem:[#allocation6 + $0x10] sm:$0xff]
    %v188 = vld [vmem:[#allocation6 + $0x18] sm:$0xff]
    %v189 = vld [vmem:[#allocation6 + $0x20] sm:$0xff]
    %v190 = vld [vmem:[#allocation6 + $0x28] sm:$0xff]
    %v191 = vld [vmem:[#allocation6 + $0x30] sm:$0xff]
    %v192 = vld [vmem:[#allocation6 + $0x38] sm:$0xff]
    %v193 = vld [vmem:[#allocation6 + $0x40] sm:$0xff]
    %v194 = vld [vmem:[#allocation6 + $0x48] sm:$0xff]
    %v195 = vld [vmem:[#allocation6 + $0x50] sm:$0xff]
    %v196 = vld [vmem:[#allocation6 + $0x58] sm:$0xff]
    %v197 = vld [vmem:[#allocation6 + $0x60] sm:$0xff]
    %v198 = vld [vmem:[#allocation6 + $0x68] sm:$0xff]
    %v199 = vld [vmem:[#allocation6 + $0x70] sm:$0xff]
    %v200 = vld [vmem:[#allocation6 + $0x78] sm:$0xff]
    %v201 = vld [vmem:[#allocation8] sm:$0xff]
    %v203 = vperm.slane %v201, 0
    %v204 = vperm.slane %v201, 1
    %v205 = vperm.slane %v201, 2
    %v206 = vperm.slane %v201, 3
    %v207 = vperm.slane %v201, 4
    %v208 = vperm.slane %v201, 5
    %v209 = vperm.slane %v201, 6
    %v210 = vperm.slane %v201, 7
    %v235 = vunpack.c.l.b16 %v185
    %v236 = vunpack.c.h.b16 %v185
    %v237 = vunpack.c.l.b16 %v186
    %v238 = vunpack.c.h.b16 %v186
    %v239 = vunpack.c.l.b16 %v187
    %v240 = vunpack.c.h.b16 %v187
    %v241 = vunpack.c.l.b16 %v188
    %v242 = vunpack.c.h.b16 %v188
    %v243 = vunpack.c.l.b16 %v189
    %v244 = vunpack.c.h.b16 %v189
    %v245 = vunpack.c.l.b16 %v190
    %v246 = vunpack.c.h.b16 %v190
    %v247 = vunpack.c.l.b16 %v191
    %v248 = vunpack.c.h.b16 %v191
    %v249 = vunpack.c.l.b16 %v192
    %v250 = vunpack.c.h.b16 %v192
    %v251 = vunpack.c.l.b16 %v193
    %v252 = vunpack.c.h.b16 %v193
    %v253 = vunpack.c.l.b16 %v194
    %v254 = vunpack.c.h.b16 %v194
    %v255 = vunpack.c.l.b16 %v195
    %v256 = vunpack.c.h.b16 %v195
    %v257 = vunpack.c.l.b16 %v196
    %v258 = vunpack.c.h.b16 %v196
    %v259 = vunpack.c.l.b16 %v197
    %v260 = vunpack.c.h.b16 %v197
    %v261 = vunpack.c.l.b16 %v198
    %v262 = vunpack.c.h.b16 %v198
    %v263 = vunpack.c.l.b16 %v199
    %v264 = vunpack.c.h.b16 %v199
    %v265 = vunpack.c.l.b16 %v200
    %v266 = vunpack.c.h.b16 %v200
    %v267 = vpack.c.b16 %v243, %v235
    %v268 = vpack.c.b16 %v244, %v236
    %v269 = vpack.c.b16 %v245, %v237
    %v270 = vpack.c.b16 %v246, %v238
    %v271 = vpack.c.b16 %v247, %v239
    %v272 = vpack.c.b16 %v248, %v240
    %v273 = vpack.c.b16 %v249, %v241
    %v274 = vpack.c.b16 %v250, %v242
    %v275 = vpack.c.b16 %v259, %v251
    %v276 = vpack.c.b16 %v260, %v252
    %v277 = vpack.c.b16 %v261, %v253
    %v278 = vpack.c.b16 %v262, %v254
    %v279 = vpack.c.b16 %v263, %v255
    %v280 = vpack.c.b16 %v264, %v256
    %v281 = vpack.c.b16 %v265, %v257
    %v282 = vpack.c.b16 %v266, %v258
    %vm299 = vcmask 261120
    %v301 = vsel %vm299, %v184, 0
    %303 = vmatpush.bf16.msra.mxu0 0
    %304 = vmatpush.bf16.msra.mxu0 0
    %305 = vmatpush.bf16.msra.mxu0 0
    %306 = vmatpush.bf16.msra.mxu0 0
    %307 = vmatpush.bf16.msra.mxu0 0
    %308 = vmatpush.bf16.msra.mxu0 0
    %309 = vmatpush.bf16.msra.mxu0 %v275
    %310 = vmatpush.bf16.msra.mxu0 %v267
    %311 = vmatmul.bf16.gmra.mxu0 %v301
    %v312 = vpop.f32.mrf.mxu0
    %v313 = vadd.f32 %v203, %v312
    %v314 = vpop.f32.mrf.mxu0
    %315 = vdwg.mxu0
    %316 = vmatpush.bf16.msra.mxu0 0
    %317 = vmatpush.bf16.msra.mxu0 0
    %318 = vmatpush.bf16.msra.mxu0 0
    %319 = vmatpush.bf16.msra.mxu0 0
    %320 = vmatpush.bf16.msra.mxu0 0
    %321 = vmatpush.bf16.msra.mxu0 0
    %322 = vmatpush.bf16.msra.mxu0 %v276
    %323 = vmatpush.bf16.msra.mxu0 %v268
    %324 = vmatmul.bf16.gmra.mxu0 %v301
    %v325 = vpop.f32.mrf.mxu0
    %v326 = vadd.f32 %v204, %v325
    %v327 = vpop.f32.mrf.mxu0
    %328 = vdwg.mxu0
    %329 = vmatpush.bf16.msra.mxu0 0
    %330 = vmatpush.bf16.msra.mxu0 0
    %331 = vmatpush.bf16.msra.mxu0 0
    %332 = vmatpush.bf16.msra.mxu0 0
    %333 = vmatpush.bf16.msra.mxu0 0
    %334 = vmatpush.bf16.msra.mxu0 0
    %335 = vmatpush.bf16.msra.mxu0 %v277
    %336 = vmatpush.bf16.msra.mxu0 %v269
    %337 = vmatmul.bf16.gmra.mxu0 %v301
    %v338 = vpop.f32.mrf.mxu0
    %v339 = vadd.f32 %v205, %v338
    %v340 = vpop.f32.mrf.mxu0
    %341 = vdwg.mxu0
    %342 = vmatpush.bf16.msra.mxu0 0
    %343 = vmatpush.bf16.msra.mxu0 0
    %344 = vmatpush.bf16.msra.mxu0 0
    %345 = vmatpush.bf16.msra.mxu0 0
    %346 = vmatpush.bf16.msra.mxu0 0
    %347 = vmatpush.bf16.msra.mxu0 0
    %348 = vmatpush.bf16.msra.mxu0 %v278
    %349 = vmatpush.bf16.msra.mxu0 %v270
    %350 = vmatmul.bf16.gmra.mxu0 %v301
    %v351 = vpop.f32.mrf.mxu0
    %v352 = vadd.f32 %v206, %v351
    %v353 = vpop.f32.mrf.mxu0
    %354 = vdwg.mxu0
    %355 = vmatpush.bf16.msra.mxu0 0
    %356 = vmatpush.bf16.msra.mxu0 0
    %357 = vmatpush.bf16.msra.mxu0 0
    %358 = vmatpush.bf16.msra.mxu0 0
    %359 = vmatpush.bf16.msra.mxu0 0
    %360 = vmatpush.bf16.msra.mxu0 0
    %361 = vmatpush.bf16.msra.mxu0 %v279
    %362 = vmatpush.bf16.msra.mxu0 %v271
    %363 = vmatmul.bf16.gmra.mxu0 %v301
    %v364 = vpop.f32.mrf.mxu0
    %v365 = vadd.f32 %v207, %v364
    %v366 = vpop.f32.mrf.mxu0
    %367 = vdwg.mxu0
    %368 = vmatpush.bf16.msra.mxu0 0
    %369 = vmatpush.bf16.msra.mxu0 0
    %370 = vmatpush.bf16.msra.mxu0 0
    %371 = vmatpush.bf16.msra.mxu0 0
    %372 = vmatpush.bf16.msra.mxu0 0
    %373 = vmatpush.bf16.msra.mxu0 0
    %374 = vmatpush.bf16.msra.mxu0 %v280
    %375 = vmatpush.bf16.msra.mxu0 %v272
    %376 = vmatmul.bf16.gmra.mxu0 %v301
    %v377 = vpop.f32.mrf.mxu0
    %v378 = vadd.f32 %v208, %v377
    %v379 = vpop.f32.mrf.mxu0
    %380 = vdwg.mxu0
    %381 = vmatpush.bf16.msra.mxu0 0
    %382 = vmatpush.bf16.msra.mxu0 0
    %383 = vmatpush.bf16.msra.mxu0 0
    %384 = vmatpush.bf16.msra.mxu0 0
    %385 = vmatpush.bf16.msra.mxu0 0
    %386 = vmatpush.bf16.msra.mxu0 0
    %387 = vmatpush.bf16.msra.mxu0 %v281
    %388 = vmatpush.bf16.msra.mxu0 %v273
    %389 = vmatmul.bf16.gmra.mxu0 %v301
    %v390 = vpop.f32.mrf.mxu0
    %v391 = vadd.f32 %v209, %v390
    %v392 = vpop.f32.mrf.mxu0
    %393 = vdwg.mxu0
    %394 = vmatpush.bf16.msra.mxu0 0
    %395 = vmatpush.bf16.msra.mxu0 0
    %396 = vmatpush.bf16.msra.mxu0 0
    %397 = vmatpush.bf16.msra.mxu0 0
    %398 = vmatpush.bf16.msra.mxu0 0
    %399 = vmatpush.bf16.msra.mxu0 0
    %400 = vmatpush.bf16.msra.mxu0 %v282
    %401 = vmatpush.bf16.msra.mxu0 %v274
    %402 = vmatmul.bf16.gmra.mxu0 %v301
    %v403 = vpop.f32.mrf.mxu0
    %v404 = vadd.f32 %v210, %v403
    %v405 = vpop.f32.mrf.mxu0
    %406 = vdwg.mxu0
    %v407 = vmax.f32 %v313, 0.0
    %v408 = vmax.f32 %v326, 0.0
    %v409 = vmax.f32 %v339, 0.0
    %v410 = vmax.f32 %v352, 0.0
    %v411 = vmax.f32 %v365, 0.0
    %v412 = vmax.f32 %v378, 0.0
    %v413 = vmax.f32 %v391, 0.0
    %v414 = vmax.f32 %v404, 0.0
    %v415 = vrot.slane %v407, 4
    %v416 = vadd.f32 %v407, %v415
    %v417 = vrot.slane %v416, 2
    %v418 = vadd.f32 %v416, %v417
    %v419 = vrot.slane %v418, 1
    %v420 = vadd.f32 %v418, %v419
    %v421 = vrot.slane %v408, 4
    %v422 = vadd.f32 %v408, %v421
    %v423 = vrot.slane %v422, 2
    %v424 = vadd.f32 %v422, %v423
    %v425 = vrot.slane %v424, 1
    %v426 = vadd.f32 %v424, %v425
    %v427 = vrot.slane %v409, 4
    %v428 = vadd.f32 %v409, %v427
    %v429 = vrot.slane %v428, 2
    %v430 = vadd.f32 %v428, %v429
    %v431 = vrot.slane %v430, 1
    %v432 = vadd.f32 %v430, %v431
    %v433 = vrot.slane %v410, 4
    %v434 = vadd.f32 %v410, %v433
    %v435 = vrot.slane %v434, 2
    %v436 = vadd.f32 %v434, %v435
    %v437 = vrot.slane %v436, 1
    %v438 = vadd.f32 %v436, %v437
    %v439 = vrot.slane %v411, 4
    %v440 = vadd.f32 %v411, %v439
    %v441 = vrot.slane %v440, 2
    %v442 = vadd.f32 %v440, %v441
    %v443 = vrot.slane %v442, 1
    %v444 = vadd.f32 %v442, %v443
    %v445 = vrot.slane %v412, 4
    %v446 = vadd.f32 %v412, %v445
    %v447 = vrot.slane %v446, 2
    %v448 = vadd.f32 %v446, %v447
    %v449 = vrot.slane %v448, 1
    %v450 = vadd.f32 %v448, %v449
    %v451 = vrot.slane %v413, 4
    %v452 = vadd.f32 %v413, %v451
    %v453 = vrot.slane %v452, 2
    %v454 = vadd.f32 %v452, %v453
    %v455 = vrot.slane %v454, 1
    %v456 = vadd.f32 %v454, %v455
    %v457 = vrot.slane %v414, 4
    %v458 = vadd.f32 %v414, %v457
    %v459 = vrot.slane %v458, 2
    %v460 = vadd.f32 %v458, %v459
    %v461 = vrot.slane %v460, 1
    %v462 = vadd.f32 %v460, %v461
    %v463 = vmul.f32 %v407, %v407
    %v464 = vmul.f32 %v408, %v408
    %v465 = vmul.f32 %v409, %v409
    %v466 = vmul.f32 %v410, %v410
    %v467 = vmul.f32 %v411, %v411
    %v468 = vmul.f32 %v412, %v412
    %v469 = vmul.f32 %v413, %v413
    %v470 = vmul.f32 %v414, %v414
    %v471 = vrot.slane %v463, 4
    %v472 = vadd.f32 %v463, %v471
    %v473 = vrot.slane %v472, 2
    %v474 = vadd.f32 %v472, %v473
    %v475 = vrot.slane %v474, 1
    %v476 = vadd.f32 %v474, %v475
    %v477 = vrot.slane %v464, 4
    %v478 = vadd.f32 %v464, %v477
    %v479 = vrot.slane %v478, 2
    %v480 = vadd.f32 %v478, %v479
    %v481 = vrot.slane %v480, 1
    %v482 = vadd.f32 %v480, %v481
    %v483 = vrot.slane %v465, 4
    %v484 = vadd.f32 %v465, %v483
    %v485 = vrot.slane %v484, 2
    %v486 = vadd.f32 %v484, %v485
    %v487 = vrot.slane %v486, 1
    %v488 = vadd.f32 %v486, %v487
    %v489 = vrot.slane %v466, 4
    %v490 = vadd.f32 %v466, %v489
    %v491 = vrot.slane %v490, 2
    %v492 = vadd.f32 %v490, %v491
    %v493 = vrot.slane %v492, 1
    %v494 = vadd.f32 %v492, %v493
    %v495 = vrot.slane %v467, 4
    %v496 = vadd.f32 %v467, %v495
    %v497 = vrot.slane %v496, 2
    %v498 = vadd.f32 %v496, %v497
    %v499 = vrot.slane %v498, 1
    %v500 = vadd.f32 %v498, %v499
    %v501 = vrot.slane %v468, 4
    %v502 = vadd.f32 %v468, %v501
    %v503 = vrot.slane %v502, 2
    %v504 = vadd.f32 %v502, %v503
    %v505 = vrot.slane %v504, 1
    %v506 = vadd.f32 %v504, %v505
    %v507 = vrot.slane %v469, 4
    %v508 = vadd.f32 %v469, %v507
    %v509 = vrot.slane %v508, 2
    %v510 = vadd.f32 %v508, %v509
    %v511 = vrot.slane %v510, 1
    %v512 = vadd.f32 %v510, %v511
    %v513 = vrot.slane %v470, 4
    %v514 = vadd.f32 %v470, %v513
    %v515 = vrot.slane %v514, 2
    %v516 = vadd.f32 %v514, %v515
    %v517 = vrot.slane %v516, 1
    %v518 = vadd.f32 %v516, %v517
    %v519 = vmul.f32 %v420, 0.125
    %v520 = vmul.f32 %v426, 0.125
    %v521 = vmul.f32 %v432, 0.125
    %v522 = vmul.f32 %v438, 0.125
    %v523 = vmul.f32 %v444, 0.125
    %v524 = vmul.f32 %v450, 0.125
    %v525 = vmul.f32 %v456, 0.125
    %v526 = vmul.f32 %v462, 0.125
    %v527 = vmul.f32 %v476, 0.125
    %v528 = vmul.f32 %v482, 0.125
    %v529 = vmul.f32 %v488, 0.125
    %v530 = vmul.f32 %v494, 0.125
    %v531 = vmul.f32 %v500, 0.125
    %v532 = vmul.f32 %v506, 0.125
    %v533 = vmul.f32 %v512, 0.125
    %v534 = vmul.f32 %v518, 0.125
    %v535 = vmul.f32 %v519, %v519
    %v536 = vmul.f32 %v520, %v520
    %v537 = vmul.f32 %v521, %v521
    %v538 = vmul.f32 %v522, %v522
    %v539 = vmul.f32 %v523, %v523
    %v540 = vmul.f32 %v524, %v524
    %v541 = vmul.f32 %v525, %v525
    %v542 = vmul.f32 %v526, %v526
    %v543 = vsub.f32 %v527, %v535
    %v544 = vsub.f32 %v528, %v536
    %v545 = vsub.f32 %v529, %v537
    %v546 = vsub.f32 %v530, %v538
    %v547 = vsub.f32 %v531, %v539
    %v548 = vsub.f32 %v532, %v540
    %v549 = vsub.f32 %v533, %v541
    %v550 = vsub.f32 %v534, %v542
    %v551 = vmax.f32 %v543, 0.0
    %v552 = vmax.f32 %v544, 0.0
    %v553 = vmax.f32 %v545, 0.0
    %v554 = vmax.f32 %v546, 0.0
    %v555 = vmax.f32 %v547, 0.0
    %v556 = vmax.f32 %v548, 0.0
    %v557 = vmax.f32 %v549, 0.0
    %v558 = vmax.f32 %v550, 0.0
    %v559 = vld [vmem:[#allocation9] sm:$0xff]
    %v560 = vsub.f32 %v407, %v519
    %v561 = vsub.f32 %v408, %v520
    %v562 = vsub.f32 %v409, %v521
    %v563 = vsub.f32 %v410, %v522
    %v564 = vsub.f32 %v411, %v523
    %v565 = vsub.f32 %v412, %v524
    %v566 = vsub.f32 %v413, %v525
    %v567 = vsub.f32 %v414, %v526
    %v569 = vperm.slane %v559, 0
    %v570 = vperm.slane %v559, 1
    %v571 = vperm.slane %v559, 2
    %v572 = vperm.slane %v559, 3
    %v573 = vperm.slane %v559, 4
    %v574 = vperm.slane %v559, 5
    %v575 = vperm.slane %v559, 6
    %v576 = vperm.slane %v559, 7
    %v585 = vmul.f32 %v569, %v560
    %v586 = vmul.f32 %v570, %v561
    %v587 = vmul.f32 %v571, %v562
    %v588 = vmul.f32 %v572, %v563
    %v589 = vmul.f32 %v573, %v564
    %v590 = vmul.f32 %v574, %v565
    %v591 = vmul.f32 %v575, %v566
    %v592 = vmul.f32 %v576, %v567
    %v593 = vadd.f32 %v551, 1e-05
    %v594 = vadd.f32 %v552, 1e-05
    %v595 = vadd.f32 %v553, 1e-05
    %v596 = vadd.f32 %v554, 1e-05
    %v597 = vadd.f32 %v555, 1e-05
    %v598 = vadd.f32 %v556, 1e-05
    %v599 = vadd.f32 %v557, 1e-05
    %v600 = vadd.f32 %v558, 1e-05
    %v601 = vrsqrt.pop %v593
    %v602 = vmul.f32 %v601, %v593
    %v603 = vmul.f32 %v602, %v601
    %v604 = vmul.f32 0.5, %v603
    %v605 = vsub.f32 1.5, %v604
    %v606 = vmul.f32 %v601, %v605
    %vm607 = vweird.f32 %v593
    %vm608 = vweird.f32 %v601
    %vm609 = vmor %vm607, %vm608
    %v610 = vsel %vm609, %v601, %v606
    %v611 = vrsqrt.pop %v594
    %v612 = vmul.f32 %v611, %v594
    %v613 = vmul.f32 %v612, %v611
    %v614 = vmul.f32 0.5, %v613
    %v615 = vsub.f32 1.5, %v614
    %v616 = vmul.f32 %v611, %v615
    %vm617 = vweird.f32 %v594
    %vm618 = vweird.f32 %v611
    %vm619 = vmor %vm617, %vm618
    %v620 = vsel %vm619, %v611, %v616
    %v621 = vrsqrt.pop %v595
    %v622 = vmul.f32 %v621, %v595
    %v623 = vmul.f32 %v622, %v621
    %v624 = vmul.f32 0.5, %v623
    %v625 = vsub.f32 1.5, %v624
    %v626 = vmul.f32 %v621, %v625
    %vm627 = vweird.f32 %v595
    %vm628 = vweird.f32 %v621
    %vm629 = vmor %vm627, %vm628
    %v630 = vsel %vm629, %v621, %v626
    %v631 = vrsqrt.pop %v596
    %v632 = vmul.f32 %v631, %v596
    %v633 = vmul.f32 %v632, %v631
    %v634 = vmul.f32 0.5, %v633
    %v635 = vsub.f32 1.5, %v634
    %v636 = vmul.f32 %v631, %v635
    %vm637 = vweird.f32 %v596
    %vm638 = vweird.f32 %v631
    %vm639 = vmor %vm637, %vm638
    %v640 = vsel %vm639, %v631, %v636
    %v641 = vrsqrt.pop %v597
    %v642 = vmul.f32 %v641, %v597
    %v643 = vmul.f32 %v642, %v641
    %v644 = vmul.f32 0.5, %v643
    %v645 = vsub.f32 1.5, %v644
    %v646 = vmul.f32 %v641, %v645
    %vm647 = vweird.f32 %v597
    %vm648 = vweird.f32 %v641
    %vm649 = vmor %vm647, %vm648
    %v650 = vsel %vm649, %v641, %v646
    %v651 = vrsqrt.pop %v598
    %v652 = vmul.f32 %v651, %v598
    %v653 = vmul.f32 %v652, %v651
    %v654 = vmul.f32 0.5, %v653
    %v655 = vsub.f32 1.5, %v654
    %v656 = vmul.f32 %v651, %v655
    %vm657 = vweird.f32 %v598
    %vm658 = vweird.f32 %v651
    %vm659 = vmor %vm657, %vm658
    %v660 = vsel %vm659, %v651, %v656
    %v661 = vrsqrt.pop %v599
    %v662 = vmul.f32 %v661, %v599
    %v663 = vmul.f32 %v662, %v661
    %v664 = vmul.f32 0.5, %v663
    %v665 = vsub.f32 1.5, %v664
    %v666 = vmul.f32 %v661, %v665
    %vm667 = vweird.f32 %v599
    %vm668 = vweird.f32 %v661
    %vm669 = vmor %vm667, %vm668
    %v670 = vsel %vm669, %v661, %v666
    %v671 = vrsqrt.pop %v600
    %v672 = vmul.f32 %v671, %v600
    %v673 = vmul.f32 %v672, %v671
    %v674 = vmul.f32 0.5, %v673
    %v675 = vsub.f32 1.5, %v674
    %v676 = vmul.f32 %v671, %v675
    %vm677 = vweird.f32 %v600
    %vm678 = vweird.f32 %v671
    %vm679 = vmor %vm677, %vm678
    %v680 = vsel %vm679, %v671, %v676
    %v681 = vmul.f32 %v585, %v610
    %v682 = vmul.f32 %v586, %v620
    %v683 = vmul.f32 %v587, %v630
    %v684 = vmul.f32 %v588, %v640
    %v685 = vmul.f32 %v589, %v650
    %v686 = vmul.f32 %v590, %v660
    %v687 = vmul.f32 %v591, %v670
    %v688 = vmul.f32 %v592, %v680
    %v689 = vld [vmem:[#allocation11] sm:$0xff]
    %v691 = vperm.slane %v689, 0
    %v692 = vperm.slane %v689, 1
    %v693 = vperm.slane %v689, 2
    %v694 = vperm.slane %v689, 3
    %v695 = vperm.slane %v689, 4
    %v696 = vperm.slane %v689, 5
    %v697 = vperm.slane %v689, 6
    %v698 = vperm.slane %v689, 7
    %v707 = vadd.f32 %v681, %v691
    %v708 = vadd.f32 %v682, %v692
    %v709 = vadd.f32 %v683, %v693
    %v710 = vadd.f32 %v684, %v694
    %v711 = vadd.f32 %v685, %v695
    %v712 = vadd.f32 %v686, %v696
    %v713 = vadd.f32 %v687, %v697
    %v714 = vadd.f32 %v688, %v698
    %v715 = vpack.c.bf16 %v707, %v707
    %v716 = vpack.c.bf16 %v708, %v708
    %v717 = vpack.c.bf16 %v709, %v709
    %v718 = vpack.c.bf16 %v710, %v710
    %v719 = vpack.c.bf16 %v711, %v711
    %v720 = vpack.c.bf16 %v712, %v712
    %v721 = vpack.c.bf16 %v713, %v713
    %v722 = vpack.c.bf16 %v714, %v714
    %v723 = vld [vmem:[#allocation12] sm:$0xff]
    %v724 = vld [vmem:[#allocation12 + $0x8] sm:$0xff]
    %v725 = vld [vmem:[#allocation12 + $0x10] sm:$0xff]
    %v726 = vld [vmem:[#allocation12 + $0x18] sm:$0xff]
    %v727 = vld [vmem:[#allocation12 + $0x20] sm:$0xff]
    %v728 = vld [vmem:[#allocation12 + $0x28] sm:$0xff]
    %v729 = vld [vmem:[#allocation12 + $0x30] sm:$0xff]
    %v730 = vld [vmem:[#allocation12 + $0x38] sm:$0xff]
    %v731 = vld [vmem:[#allocation12 + $0x40] sm:$0xff]
    %v732 = vld [vmem:[#allocation12 + $0x48] sm:$0xff]
    %v733 = vld [vmem:[#allocation12 + $0x50] sm:$0xff]
    %v734 = vld [vmem:[#allocation12 + $0x58] sm:$0xff]
    %v735 = vld [vmem:[#allocation12 + $0x60] sm:$0xff]
    %v736 = vld [vmem:[#allocation12 + $0x68] sm:$0xff]
    %v737 = vld [vmem:[#allocation12 + $0x70] sm:$0xff]
    %v738 = vld [vmem:[#allocation12 + $0x78] sm:$0xff]
    %v739 = vld [vmem:[#allocation12 + $0x80] sm:$0xff]
    %v740 = vld [vmem:[#allocation12 + $0x88] sm:$0xff]
    %v741 = vld [vmem:[#allocation12 + $0x90] sm:$0xff]
    %v742 = vld [vmem:[#allocation12 + $0x98] sm:$0xff]
    %v743 = vld [vmem:[#allocation12 + $0xa0] sm:$0xff]
    %v744 = vld [vmem:[#allocation12 + $0xa8] sm:$0xff]
    %v745 = vld [vmem:[#allocation12 + $0xb0] sm:$0xff]
    %v746 = vld [vmem:[#allocation12 + $0xb8] sm:$0xff]
    %v747 = vld [vmem:[#allocation12 + $0xc0] sm:$0xff]
    %v748 = vld [vmem:[#allocation12 + $0xc8] sm:$0xff]
    %v749 = vld [vmem:[#allocation12 + $0xd0] sm:$0xff]
    %v750 = vld [vmem:[#allocation12 + $0xd8] sm:$0xff]
    %v751 = vld [vmem:[#allocation12 + $0xe0] sm:$0xff]
    %v752 = vld [vmem:[#allocation12 + $0xe8] sm:$0xff]
    %v753 = vld [vmem:[#allocation12 + $0xf0] sm:$0xff]
    %v754 = vld [vmem:[#allocation12 + $0xf8] sm:$0xff]
    %v755 = vld [vmem:[#allocation12 + $0x100] sm:$0xff]
    %v756 = vld [vmem:[#allocation12 + $0x108] sm:$0xff]
    %v757 = vld [vmem:[#allocation12 + $0x110] sm:$0xff]
    %v758 = vld [vmem:[#allocation12 + $0x118] sm:$0xff]
    %v759 = vld [vmem:[#allocation12 + $0x120] sm:$0xff]
    %v760 = vld [vmem:[#allocation12 + $0x128] sm:$0xff]
    %v761 = vld [vmem:[#allocation12 + $0x130] sm:$0xff]
    %v762 = vld [vmem:[#allocation12 + $0x138] sm:$0xff]
    %v763 = vld [vmem:[#allocation12 + $0x140] sm:$0xff]
    %v764 = vld [vmem:[#allocation12 + $0x148] sm:$0xff]
    %v765 = vld [vmem:[#allocation12 + $0x150] sm:$0xff]
    %v766 = vld [vmem:[#allocation12 + $0x158] sm:$0xff]
    %v767 = vld [vmem:[#allocation12 + $0x160] sm:$0xff]
    %v768 = vld [vmem:[#allocation12 + $0x168] sm:$0xff]
    %v769 = vld [vmem:[#allocation12 + $0x170] sm:$0xff]
    %v770 = vld [vmem:[#allocation12 + $0x178] sm:$0xff]
    %v771 = vld [vmem:[#allocation12 + $0x180] sm:$0xff]
    %v772 = vld [vmem:[#allocation12 + $0x188] sm:$0xff]
    %v773 = vld [vmem:[#allocation12 + $0x190] sm:$0xff]
    %v774 = vld [vmem:[#allocation12 + $0x198] sm:$0xff]
    %v775 = vld [vmem:[#allocation12 + $0x1a0] sm:$0xff]
    %v776 = vld [vmem:[#allocation12 + $0x1a8] sm:$0xff]
    %v777 = vld [vmem:[#allocation12 + $0x1b0] sm:$0xff]
    %v778 = vld [vmem:[#allocation12 + $0x1b8] sm:$0xff]
    %v779 = vld [vmem:[#allocation12 + $0x1c0] sm:$0xff]
    %v780 = vld [vmem:[#allocation12 + $0x1c8] sm:$0xff]
    %v781 = vld [vmem:[#allocation12 + $0x1d0] sm:$0xff]
    %v782 = vld [vmem:[#allocation12 + $0x1d8] sm:$0xff]
    %v783 = vld [vmem:[#allocation12 + $0x1e0] sm:$0xff]
    %v784 = vld [vmem:[#allocation12 + $0x1e8] sm:$0xff]
    %v785 = vld [vmem:[#allocation12 + $0x1f0] sm:$0xff]
    %v786 = vld [vmem:[#allocation12 + $0x1f8] sm:$0xff]
    %v787 = vld [vmem:[#allocation12 + $0x200] sm:$0xff]
    %v788 = vld [vmem:[#allocation12 + $0x208] sm:$0xff]
    %v789 = vld [vmem:[#allocation12 + $0x210] sm:$0xff]
    %v790 = vld [vmem:[#allocation12 + $0x218] sm:$0xff]
    %v791 = vld [vmem:[#allocation12 + $0x220] sm:$0xff]
    %v792 = vld [vmem:[#allocation12 + $0x228] sm:$0xff]
    %v793 = vld [vmem:[#allocation12 + $0x230] sm:$0xff]
    %v794 = vld [vmem:[#allocation12 + $0x238] sm:$0xff]
    %v795 = vld [vmem:[#allocation12 + $0x240] sm:$0xff]
    %v796 = vld [vmem:[#allocation12 + $0x248] sm:$0xff]
    %v797 = vld [vmem:[#allocation12 + $0x250] sm:$0xff]
    %v798 = vld [vmem:[#allocation12 + $0x258] sm:$0xff]
    %v799 = vld [vmem:[#allocation12 + $0x260] sm:$0xff]
    %v800 = vld [vmem:[#allocation12 + $0x268] sm:$0xff]
    %v801 = vld [vmem:[#allocation12 + $0x270] sm:$0xff]
    %v802 = vld [vmem:[#allocation12 + $0x278] sm:$0xff]
    %v803 = vld [vmem:[#allocation12 + $0x280] sm:$0xff]
    %v804 = vld [vmem:[#allocation12 + $0x288] sm:$0xff]
    %v805 = vld [vmem:[#allocation12 + $0x290] sm:$0xff]
    %v806 = vld [vmem:[#allocation12 + $0x298] sm:$0xff]
    %v807 = vld [vmem:[#allocation12 + $0x2a0] sm:$0xff]
    %v808 = vld [vmem:[#allocation12 + $0x2a8] sm:$0xff]
    %v809 = vld [vmem:[#allocation12 + $0x2b0] sm:$0xff]
    %v810 = vld [vmem:[#allocation12 + $0x2b8] sm:$0xff]
    %v811 = vld [vmem:[#allocation12 + $0x2c0] sm:$0xff]
    %v812 = vld [vmem:[#allocation12 + $0x2c8] sm:$0xff]
    %v813 = vld [vmem:[#allocation12 + $0x2d0] sm:$0xff]
    %v814 = vld [vmem:[#allocation12 + $0x2d8] sm:$0xff]
    %v815 = vld [vmem:[#allocation12 + $0x2e0] sm:$0xff]
    %v816 = vld [vmem:[#allocation12 + $0x2e8] sm:$0xff]
    %v817 = vld [vmem:[#allocation12 + $0x2f0] sm:$0xff]
    %v818 = vld [vmem:[#allocation12 + $0x2f8] sm:$0xff]
    %v819 = vld [vmem:[#allocation12 + $0x300] sm:$0xff]
    %v820 = vld [vmem:[#allocation12 + $0x308] sm:$0xff]
    %v821 = vld [vmem:[#allocation12 + $0x310] sm:$0xff]
    %v822 = vld [vmem:[#allocation12 + $0x318] sm:$0xff]
    %v823 = vld [vmem:[#allocation12 + $0x320] sm:$0xff]
    %v824 = vld [vmem:[#allocation12 + $0x328] sm:$0xff]
    %v825 = vld [vmem:[#allocation12 + $0x330] sm:$0xff]
    %v826 = vld [vmem:[#allocation12 + $0x338] sm:$0xff]
    %v827 = vld [vmem:[#allocation12 + $0x340] sm:$0xff]
    %v828 = vld [vmem:[#allocation12 + $0x348] sm:$0xff]
    %v829 = vld [vmem:[#allocation12 + $0x350] sm:$0xff]
    %v830 = vld [vmem:[#allocation12 + $0x358] sm:$0xff]
    %v831 = vld [vmem:[#allocation12 + $0x360] sm:$0xff]
    %v832 = vld [vmem:[#allocation12 + $0x368] sm:$0xff]
    %v833 = vld [vmem:[#allocation12 + $0x370] sm:$0xff]
    %v834 = vld [vmem:[#allocation12 + $0x378] sm:$0xff]
    %v835 = vld [vmem:[#allocation12 + $0x380] sm:$0xff]
    %v836 = vld [vmem:[#allocation12 + $0x388] sm:$0xff]
    %v837 = vld [vmem:[#allocation12 + $0x390] sm:$0xff]
    %v838 = vld [vmem:[#allocation12 + $0x398] sm:$0xff]
    %v839 = vld [vmem:[#allocation12 + $0x3a0] sm:$0xff]
    %v840 = vld [vmem:[#allocation12 + $0x3a8] sm:$0xff]
    %v841 = vld [vmem:[#allocation12 + $0x3b0] sm:$0xff]
    %v842 = vld [vmem:[#allocation12 + $0x3b8] sm:$0xff]
    %v843 = vld [vmem:[#allocation12 + $0x3c0] sm:$0xff]
    %v844 = vld [vmem:[#allocation12 + $0x3c8] sm:$0xff]
    %v845 = vld [vmem:[#allocation12 + $0x3d0] sm:$0xff]
    %v846 = vld [vmem:[#allocation12 + $0x3d8] sm:$0xff]
    %v847 = vld [vmem:[#allocation12 + $0x3e0] sm:$0xff]
    %v848 = vld [vmem:[#allocation12 + $0x3e8] sm:$0xff]
    %v849 = vld [vmem:[#allocation12 + $0x3f0] sm:$0xff]
    %v850 = vld [vmem:[#allocation12 + $0x3f8] sm:$0xff]
    %v851 = vld [vmem:[#allocation12 + $0x400] sm:$0xff]
    %v852 = vld [vmem:[#allocation12 + $0x408] sm:$0xff]
    %v853 = vld [vmem:[#allocation12 + $0x410] sm:$0xff]
    %v854 = vld [vmem:[#allocation12 + $0x418] sm:$0xff]
    %v855 = vld [vmem:[#allocation12 + $0x420] sm:$0xff]
    %v856 = vld [vmem:[#allocation12 + $0x428] sm:$0xff]
    %v857 = vld [vmem:[#allocation12 + $0x430] sm:$0xff]
    %v858 = vld [vmem:[#allocation12 + $0x438] sm:$0xff]
    %v859 = vld [vmem:[#allocation12 + $0x440] sm:$0xff]
    %v860 = vld [vmem:[#allocation12 + $0x448] sm:$0xff]
    %v861 = vld [vmem:[#allocation12 + $0x450] sm:$0xff]
    %v862 = vld [vmem:[#allocation12 + $0x458] sm:$0xff]
    %v863 = vld [vmem:[#allocation12 + $0x460] sm:$0xff]
    %v864 = vld [vmem:[#allocation12 + $0x468] sm:$0xff]
    %v865 = vld [vmem:[#allocation12 + $0x470] sm:$0xff]
    %v866 = vld [vmem:[#allocation12 + $0x478] sm:$0xff]
    %v867 = vld [vmem:[#allocation12 + $0x480] sm:$0xff]
    %v868 = vld [vmem:[#allocation12 + $0x488] sm:$0xff]
    %v869 = vld [vmem:[#allocation12 + $0x490] sm:$0xff]
    %v870 = vld [vmem:[#allocation12 + $0x498] sm:$0xff]
    %v871 = vld [vmem:[#allocation12 + $0x4a0] sm:$0xff]
    %v872 = vld [vmem:[#allocation12 + $0x4a8] sm:$0xff]
    %v873 = vld [vmem:[#allocation12 + $0x4b0] sm:$0xff]
    %v874 = vld [vmem:[#allocation12 + $0x4b8] sm:$0xff]
    %v875 = vld [vmem:[#allocation12 + $0x4c0] sm:$0xff]
    %v876 = vld [vmem:[#allocation12 + $0x4c8] sm:$0xff]
    %v877 = vld [vmem:[#allocation12 + $0x4d0] sm:$0xff]
    %v878 = vld [vmem:[#allocation12 + $0x4d8] sm:$0xff]
    %v879 = vld [vmem:[#allocation12 + $0x4e0] sm:$0xff]
    %v880 = vld [vmem:[#allocation12 + $0x4e8] sm:$0xff]
    %v881 = vld [vmem:[#allocation12 + $0x4f0] sm:$0xff]
    %v882 = vld [vmem:[#allocation12 + $0x4f8] sm:$0xff]
    %v883 = vld [vmem:[#allocation12 + $0x500] sm:$0xff]
    %v884 = vld [vmem:[#allocation12 + $0x508] sm:$0xff]
    %v885 = vld [vmem:[#allocation12 + $0x510] sm:$0xff]
    %v886 = vld [vmem:[#allocation12 + $0x518] sm:$0xff]
    %v887 = vld [vmem:[#allocation12 + $0x520] sm:$0xff]
    %v888 = vld [vmem:[#allocation12 + $0x528] sm:$0xff]
    %v889 = vld [vmem:[#allocation12 + $0x530] sm:$0xff]
    %v890 = vld [vmem:[#allocation12 + $0x538] sm:$0xff]
    %v891 = vld [vmem:[#allocation12 + $0x540] sm:$0xff]
    %v892 = vld [vmem:[#allocation12 + $0x548] sm:$0xff]
    %v893 = vld [vmem:[#allocation12 + $0x550] sm:$0xff]
    %v894 = vld [vmem:[#allocation12 + $0x558] sm:$0xff]
    %v895 = vld [vmem:[#allocation12 + $0x560] sm:$0xff]
    %v896 = vld [vmem:[#allocation12 + $0x568] sm:$0xff]
    %v897 = vld [vmem:[#allocation12 + $0x570] sm:$0xff]
    %v898 = vld [vmem:[#allocation12 + $0x578] sm:$0xff]
    %v899 = vld [vmem:[#allocation12 + $0x580] sm:$0xff]
    %v900 = vld [vmem:[#allocation12 + $0x588] sm:$0xff]
    %v901 = vld [vmem:[#allocation12 + $0x590] sm:$0xff]
    %v902 = vld [vmem:[#allocation12 + $0x598] sm:$0xff]
    %v903 = vld [vmem:[#allocation12 + $0x5a0] sm:$0xff]
    %v904 = vld [vmem:[#allocation12 + $0x5a8] sm:$0xff]
    %v905 = vld [vmem:[#allocation12 + $0x5b0] sm:$0xff]
    %v906 = vld [vmem:[#allocation12 + $0x5b8] sm:$0xff]
    %v907 = vld [vmem:[#allocation12 + $0x5c0] sm:$0xff]
    %v908 = vld [vmem:[#allocation12 + $0x5c8] sm:$0xff]
    %v909 = vld [vmem:[#allocation12 + $0x5d0] sm:$0xff]
    %v910 = vld [vmem:[#allocation12 + $0x5d8] sm:$0xff]
    %v911 = vld [vmem:[#allocation12 + $0x5e0] sm:$0xff]
    %v912 = vld [vmem:[#allocation12 + $0x5e8] sm:$0xff]
    %v913 = vld [vmem:[#allocation12 + $0x5f0] sm:$0xff]
    %v914 = vld [vmem:[#allocation12 + $0x5f8] sm:$0xff]
    %v915 = vld [vmem:[#allocation12 + $0x600] sm:$0xff]
    %v916 = vld [vmem:[#allocation12 + $0x608] sm:$0xff]
    %v917 = vld [vmem:[#allocation12 + $0x610] sm:$0xff]
    %v918 = vld [vmem:[#allocation12 + $0x618] sm:$0xff]
    %v919 = vld [vmem:[#allocation12 + $0x620] sm:$0xff]
    %v920 = vld [vmem:[#allocation12 + $0x628] sm:$0xff]
    %v921 = vld [vmem:[#allocation12 + $0x630] sm:$0xff]
    %v922 = vld [vmem:[#allocation12 + $0x638] sm:$0xff]
    %v923 = vld [vmem:[#allocation12 + $0x640] sm:$0xff]
    %v924 = vld [vmem:[#allocation12 + $0x648] sm:$0xff]
    %v925 = vld [vmem:[#allocation12 + $0x650] sm:$0xff]
    %v926 = vld [vmem:[#allocation12 + $0x658] sm:$0xff]
    %v927 = vld [vmem:[#allocation12 + $0x660] sm:$0xff]
    %v928 = vld [vmem:[#allocation12 + $0x668] sm:$0xff]
    %v929 = vld [vmem:[#allocation12 + $0x670] sm:$0xff]
    %v930 = vld [vmem:[#allocation12 + $0x678] sm:$0xff]
    %v931 = vld [vmem:[#allocation12 + $0x680] sm:$0xff]
    %v932 = vld [vmem:[#allocation12 + $0x688] sm:$0xff]
    %v933 = vld [vmem:[#allocation12 + $0x690] sm:$0xff]
    %v934 = vld [vmem:[#allocation12 + $0x698] sm:$0xff]
    %v935 = vld [vmem:[#allocation12 + $0x6a0] sm:$0xff]
    %v936 = vld [vmem:[#allocation12 + $0x6a8] sm:$0xff]
    %v937 = vld [vmem:[#allocation12 + $0x6b0] sm:$0xff]
    %v938 = vld [vmem:[#allocation12 + $0x6b8] sm:$0xff]
    %v939 = vld [vmem:[#allocation12 + $0x6c0] sm:$0xff]
    %v940 = vld [vmem:[#allocation12 + $0x6c8] sm:$0xff]
    %v941 = vld [vmem:[#allocation12 + $0x6d0] sm:$0xff]
    %v942 = vld [vmem:[#allocation12 + $0x6d8] sm:$0xff]
    %v943 = vld [vmem:[#allocation12 + $0x6e0] sm:$0xff]
    %v944 = vld [vmem:[#allocation12 + $0x6e8] sm:$0xff]
    %v945 = vld [vmem:[#allocation12 + $0x6f0] sm:$0xff]
    %v946 = vld [vmem:[#allocation12 + $0x6f8] sm:$0xff]
    %v947 = vld [vmem:[#allocation12 + $0x700] sm:$0xff]
    %v948 = vld [vmem:[#allocation12 + $0x708] sm:$0xff]
    %v949 = vld [vmem:[#allocation12 + $0x710] sm:$0xff]
    %v950 = vld [vmem:[#allocation12 + $0x718] sm:$0xff]
    %v951 = vld [vmem:[#allocation12 + $0x720] sm:$0xff]
    %v952 = vld [vmem:[#allocation12 + $0x728] sm:$0xff]
    %v953 = vld [vmem:[#allocation12 + $0x730] sm:$0xff]
    %v954 = vld [vmem:[#allocation12 + $0x738] sm:$0xff]
    %v955 = vld [vmem:[#allocation12 + $0x740] sm:$0xff]
    %v956 = vld [vmem:[#allocation12 + $0x748] sm:$0xff]
    %v957 = vld [vmem:[#allocation12 + $0x750] sm:$0xff]
    %v958 = vld [vmem:[#allocation12 + $0x758] sm:$0xff]
    %v959 = vld [vmem:[#allocation12 + $0x760] sm:$0xff]
    %v960 = vld [vmem:[#allocation12 + $0x768] sm:$0xff]
    %v961 = vld [vmem:[#allocation12 + $0x770] sm:$0xff]
    %v962 = vld [vmem:[#allocation12 + $0x778] sm:$0xff]
    %v963 = vld [vmem:[#allocation12 + $0x780] sm:$0xff]
    %v964 = vld [vmem:[#allocation12 + $0x788] sm:$0xff]
    %v965 = vld [vmem:[#allocation12 + $0x790] sm:$0xff]
    %v966 = vld [vmem:[#allocation12 + $0x798] sm:$0xff]
    %v967 = vld [vmem:[#allocation12 + $0x7a0] sm:$0xff]
    %v968 = vld [vmem:[#allocation12 + $0x7a8] sm:$0xff]
    %v969 = vld [vmem:[#allocation12 + $0x7b0] sm:$0xff]
    %v970 = vld [vmem:[#allocation12 + $0x7b8] sm:$0xff]
    %v971 = vld [vmem:[#allocation12 + $0x7c0] sm:$0xff]
    %v972 = vld [vmem:[#allocation12 + $0x7c8] sm:$0xff]
    %v973 = vld [vmem:[#allocation12 + $0x7d0] sm:$0xff]
    %v974 = vld [vmem:[#allocation12 + $0x7d8] sm:$0xff]
    %v975 = vld [vmem:[#allocation12 + $0x7e0] sm:$0xff]
    %v976 = vld [vmem:[#allocation12 + $0x7e8] sm:$0xff]
    %v977 = vld [vmem:[#allocation12 + $0x7f0] sm:$0xff]
    %v978 = vld [vmem:[#allocation12 + $0x7f8] sm:$0xff]
    %v979 = vld [vmem:[%s6] sm:$0xf]
    %v981 = vperm.slane %v979, 0
    %v982 = vperm.slane %v979, 1
    %v983 = vperm.slane %v979, 2
    %v984 = vperm.slane %v979, 3
    %v1245 = vunpack.c.l.b16 %v723
    %v1246 = vunpack.c.h.b16 %v723
    %v1247 = vunpack.c.l.b16 %v724
    %v1248 = vunpack.c.h.b16 %v724
    %v1249 = vunpack.c.l.b16 %v725
    %v1250 = vunpack.c.h.b16 %v725
    %v1251 = vunpack.c.l.b16 %v726
    %v1252 = vunpack.c.h.b16 %v726
    %v1253 = vunpack.c.l.b16 %v727
    %v1254 = vunpack.c.h.b16 %v727
    %v1255 = vunpack.c.l.b16 %v728
    %v1256 = vunpack.c.h.b16 %v728
    %v1257 = vunpack.c.l.b16 %v729
    %v1258 = vunpack.c.h.b16 %v729
    %v1259 = vunpack.c.l.b16 %v730
    %v1260 = vunpack.c.h.b16 %v730
    %v1261 = vunpack.c.l.b16 %v731
    %v1262 = vunpack.c.h.b16 %v731
    %v1263 = vunpack.c.l.b16 %v732
    %v1264 = vunpack.c.h.b16 %v732
    %v1265 = vunpack.c.l.b16 %v733
    %v1266 = vunpack.c.h.b16 %v733
    %v1267 = vunpack.c.l.b16 %v734
    %v1268 = vunpack.c.h.b16 %v734
    %v1269 = vunpack.c.l.b16 %v735
    %v1270 = vunpack.c.h.b16 %v735
    %v1271 = vunpack.c.l.b16 %v736
    %v1272 = vunpack.c.h.b16 %v736
    %v1273 = vunpack.c.l.b16 %v737
    %v1274 = vunpack.c.h.b16 %v737
    %v1275 = vunpack.c.l.b16 %v738
    %v1276 = vunpack.c.h.b16 %v738
    %v1277 = vunpack.c.l.b16 %v739
    %v1278 = vunpack.c.h.b16 %v739
    %v1279 = vunpack.c.l.b16 %v740
    %v1280 = vunpack.c.h.b16 %v740
    %v1281 = vunpack.c.l.b16 %v741
    %v1282 = vunpack.c.h.b16 %v741
    %v1283 = vunpack.c.l.b16 %v742
    %v1284 = vunpack.c.h.b16 %v742
    %v1285 = vunpack.c.l.b16 %v743
    %v1286 = vunpack.c.h.b16 %v743
    %v1287 = vunpack.c.l.b16 %v744
    %v1288 = vunpack.c.h.b16 %v744
    %v1289 = vunpack.c.l.b16 %v745
    %v1290 = vunpack.c.h.b16 %v745
    %v1291 = vunpack.c.l.b16 %v746
    %v1292 = vunpack.c.h.b16 %v746
    %v1293 = vunpack.c.l.b16 %v747
    %v1294 = vunpack.c.h.b16 %v747
    %v1295 = vunpack.c.l.b16 %v748
    %v1296 = vunpack.c.h.b16 %v748
    %v1297 = vunpack.c.l.b16 %v749
    %v1298 = vunpack.c.h.b16 %v749
    %v1299 = vunpack.c.l.b16 %v750
    %v1300 = vunpack.c.h.b16 %v750
    %v1301 = vunpack.c.l.b16 %v751
    %v1302 = vunpack.c.h.b16 %v751
    %v1303 = vunpack.c.l.b16 %v752
    %v1304 = vunpack.c.h.b16 %v752
    %v1305 = vunpack.c.l.b16 %v753
    %v1306 = vunpack.c.h.b16 %v753
    %v1307 = vunpack.c.l.b16 %v754
    %v1308 = vunpack.c.h.b16 %v754
    %v1309 = vunpack.c.l.b16 %v755
    %v1310 = vunpack.c.h.b16 %v755
    %v1311 = vunpack.c.l.b16 %v756
    %v1312 = vunpack.c.h.b16 %v756
    %v1313 = vunpack.c.l.b16 %v757
    %v1314 = vunpack.c.h.b16 %v757
    %v1315 = vunpack.c.l.b16 %v758
    %v1316 = vunpack.c.h.b16 %v758
    %v1317 = vunpack.c.l.b16 %v759
    %v1318 = vunpack.c.h.b16 %v759
    %v1319 = vunpack.c.l.b16 %v760
    %v1320 = vunpack.c.h.b16 %v760
    %v1321 = vunpack.c.l.b16 %v761
    %v1322 = vunpack.c.h.b16 %v761
    %v1323 = vunpack.c.l.b16 %v762
    %v1324 = vunpack.c.h.b16 %v762
    %v1325 = vunpack.c.l.b16 %v763
    %v1326 = vunpack.c.h.b16 %v763
    %v1327 = vunpack.c.l.b16 %v764
    %v1328 = vunpack.c.h.b16 %v764
    %v1329 = vunpack.c.l.b16 %v765
    %v1330 = vunpack.c.h.b16 %v765
    %v1331 = vunpack.c.l.b16 %v766
    %v1332 = vunpack.c.h.b16 %v766
    %v1333 = vunpack.c.l.b16 %v767
    %v1334 = vunpack.c.h.b16 %v767
    %v1335 = vunpack.c.l.b16 %v768
    %v1336 = vunpack.c.h.b16 %v768
    %v1337 = vunpack.c.l.b16 %v769
    %v1338 = vunpack.c.h.b16 %v769
    %v1339 = vunpack.c.l.b16 %v770
    %v1340 = vunpack.c.h.b16 %v770
    %v1341 = vunpack.c.l.b16 %v771
    %v1342 = vunpack.c.h.b16 %v771
    %v1343 = vunpack.c.l.b16 %v772
    %v1344 = vunpack.c.h.b16 %v772
    %v1345 = vunpack.c.l.b16 %v773
    %v1346 = vunpack.c.h.b16 %v773
    %v1347 = vunpack.c.l.b16 %v774
    %v1348 = vunpack.c.h.b16 %v774
    %v1349 = vunpack.c.l.b16 %v775
    %v1350 = vunpack.c.h.b16 %v775
    %v1351 = vunpack.c.l.b16 %v776
    %v1352 = vunpack.c.h.b16 %v776
    %v1353 = vunpack.c.l.b16 %v777
    %v1354 = vunpack.c.h.b16 %v777
    %v1355 = vunpack.c.l.b16 %v778
    %v1356 = vunpack.c.h.b16 %v778
    %v1357 = vunpack.c.l.b16 %v779
    %v1358 = vunpack.c.h.b16 %v779
    %v1359 = vunpack.c.l.b16 %v780
    %v1360 = vunpack.c.h.b16 %v780
    %v1361 = vunpack.c.l.b16 %v781
    %v1362 = vunpack.c.h.b16 %v781
    %v1363 = vunpack.c.l.b16 %v782
    %v1364 = vunpack.c.h.b16 %v782
    %v1365 = vunpack.c.l.b16 %v783
    %v1366 = vunpack.c.h.b16 %v783
    %v1367 = vunpack.c.l.b16 %v784
    %v1368 = vunpack.c.h.b16 %v784
    %v1369 = vunpack.c.l.b16 %v785
    %v1370 = vunpack.c.h.b16 %v785
    %v1371 = vunpack.c.l.b16 %v786
    %v1372 = vunpack.c.h.b16 %v786
    %v1373 = vunpack.c.l.b16 %v787
    %v1374 = vunpack.c.h.b16 %v787
    %v1375 = vunpack.c.l.b16 %v788
    %v1376 = vunpack.c.h.b16 %v788
    %v1377 = vunpack.c.l.b16 %v789
    %v1378 = vunpack.c.h.b16 %v789
    %v1379 = vunpack.c.l.b16 %v790
    %v1380 = vunpack.c.h.b16 %v790
    %v1381 = vunpack.c.l.b16 %v791
    %v1382 = vunpack.c.h.b16 %v791
    %v1383 = vunpack.c.l.b16 %v792
    %v1384 = vunpack.c.h.b16 %v792
    %v1385 = vunpack.c.l.b16 %v793
    %v1386 = vunpack.c.h.b16 %v793
    %v1387 = vunpack.c.l.b16 %v794
    %v1388 = vunpack.c.h.b16 %v794
    %v1389 = vunpack.c.l.b16 %v795
    %v1390 = vunpack.c.h.b16 %v795
    %v1391 = vunpack.c.l.b16 %v796
    %v1392 = vunpack.c.h.b16 %v796
    %v1393 = vunpack.c.l.b16 %v797
    %v1394 = vunpack.c.h.b16 %v797
    %v1395 = vunpack.c.l.b16 %v798
    %v1396 = vunpack.c.h.b16 %v798
    %v1397 = vunpack.c.l.b16 %v799
    %v1398 = vunpack.c.h.b16 %v799
    %v1399 = vunpack.c.l.b16 %v800
    %v1400 = vunpack.c.h.b16 %v800
    %v1401 = vunpack.c.l.b16 %v801
    %v1402 = vunpack.c.h.b16 %v801
    %v1403 = vunpack.c.l.b16 %v802
    %v1404 = vunpack.c.h.b16 %v802
    %v1405 = vunpack.c.l.b16 %v803
    %v1406 = vunpack.c.h.b16 %v803
    %v1407 = vunpack.c.l.b16 %v804
    %v1408 = vunpack.c.h.b16 %v804
    %v1409 = vunpack.c.l.b16 %v805
    %v1410 = vunpack.c.h.b16 %v805
    %v1411 = vunpack.c.l.b16 %v806
    %v1412 = vunpack.c.h.b16 %v806
    %v1413 = vunpack.c.l.b16 %v807
    %v1414 = vunpack.c.h.b16 %v807
    %v1415 = vunpack.c.l.b16 %v808
    %v1416 = vunpack.c.h.b16 %v808
    %v1417 = vunpack.c.l.b16 %v809
    %v1418 = vunpack.c.h.b16 %v809
    %v1419 = vunpack.c.l.b16 %v810
    %v1420 = vunpack.c.h.b16 %v810
    %v1421 = vunpack.c.l.b16 %v811
    %v1422 = vunpack.c.h.b16 %v811
    %v1423 = vunpack.c.l.b16 %v812
    %v1424 = vunpack.c.h.b16 %v812
    %v1425 = vunpack.c.l.b16 %v813
    %v1426 = vunpack.c.h.b16 %v813
    %v1427 = vunpack.c.l.b16 %v814
    %v1428 = vunpack.c.h.b16 %v814
    %v1429 = vunpack.c.l.b16 %v815
    %v1430 = vunpack.c.h.b16 %v815
    %v1431 = vunpack.c.l.b16 %v816
    %v1432 = vunpack.c.h.b16 %v816
    %v1433 = vunpack.c.l.b16 %v817
    %v1434 = vunpack.c.h.b16 %v817
    %v1435 = vunpack.c.l.b16 %v818
    %v1436 = vunpack.c.h.b16 %v818
    %v1437 = vunpack.c.l.b16 %v819
    %v1438 = vunpack.c.h.b16 %v819
    %v1439 = vunpack.c.l.b16 %v820
    %v1440 = vunpack.c.h.b16 %v820
    %v1441 = vunpack.c.l.b16 %v821
    %v1442 = vunpack.c.h.b16 %v821
    %v1443 = vunpack.c.l.b16 %v822
    %v1444 = vunpack.c.h.b16 %v822
    %v1445 = vunpack.c.l.b16 %v823
    %v1446 = vunpack.c.h.b16 %v823
    %v1447 = vunpack.c.l.b16 %v824
    %v1448 = vunpack.c.h.b16 %v824
    %v1449 = vunpack.c.l.b16 %v825
    %v1450 = vunpack.c.h.b16 %v825
    %v1451 = vunpack.c.l.b16 %v826
    %v1452 = vunpack.c.h.b16 %v826
    %v1453 = vunpack.c.l.b16 %v827
    %v1454 = vunpack.c.h.b16 %v827
    %v1455 = vunpack.c.l.b16 %v828
    %v1456 = vunpack.c.h.b16 %v828
    %v1457 = vunpack.c.l.b16 %v829
    %v1458 = vunpack.c.h.b16 %v829
    %v1459 = vunpack.c.l.b16 %v830
    %v1460 = vunpack.c.h.b16 %v830
    %v1461 = vunpack.c.l.b16 %v831
    %v1462 = vunpack.c.h.b16 %v831
    %v1463 = vunpack.c.l.b16 %v832
    %v1464 = vunpack.c.h.b16 %v832
    %v1465 = vunpack.c.l.b16 %v833
    %v1466 = vunpack.c.h.b16 %v833
    %v1467 = vunpack.c.l.b16 %v834
    %v1468 = vunpack.c.h.b16 %v834
    %v1469 = vunpack.c.l.b16 %v835
    %v1470 = vunpack.c.h.b16 %v835
    %v1471 = vunpack.c.l.b16 %v836
    %v1472 = vunpack.c.h.b16 %v836
    %v1473 = vunpack.c.l.b16 %v837
    %v1474 = vunpack.c.h.b16 %v837
    %v1475 = vunpack.c.l.b16 %v838
    %v1476 = vunpack.c.h.b16 %v838
    %v1477 = vunpack.c.l.b16 %v839
    %v1478 = vunpack.c.h.b16 %v839
    %v1479 = vunpack.c.l.b16 %v840
    %v1480 = vunpack.c.h.b16 %v840
    %v1481 = vunpack.c.l.b16 %v841
    %v1482 = vunpack.c.h.b16 %v841
    %v1483 = vunpack.c.l.b16 %v842
    %v1484 = vunpack.c.h.b16 %v842
    %v1485 = vunpack.c.l.b16 %v843
    %v1486 = vunpack.c.h.b16 %v843
    %v1487 = vunpack.c.l.b16 %v844
    %v1488 = vunpack.c.h.b16 %v844
    %v1489 = vunpack.c.l.b16 %v845
    %v1490 = vunpack.c.h.b16 %v845
    %v1491 = vunpack.c.l.b16 %v846
    %v1492 = vunpack.c.h.b16 %v846
    %v1493 = vunpack.c.l.b16 %v847
    %v1494 = vunpack.c.h.b16 %v847
    %v1495 = vunpack.c.l.b16 %v848
    %v1496 = vunpack.c.h.b16 %v848
    %v1497 = vunpack.c.l.b16 %v849
    %v1498 = vunpack.c.h.b16 %v849
    %v1499 = vunpack.c.l.b16 %v850
    %v1500 = vunpack.c.h.b16 %v850
    %v1501 = vunpack.c.l.b16 %v851
    %v1502 = vunpack.c.h.b16 %v851
    %v1503 = vunpack.c.l.b16 %v852
    %v1504 = vunpack.c.h.b16 %v852
    %v1505 = vunpack.c.l.b16 %v853
    %v1506 = vunpack.c.h.b16 %v853
    %v1507 = vunpack.c.l.b16 %v854
    %v1508 = vunpack.c.h.b16 %v854
    %v1509 = vunpack.c.l.b16 %v855
    %v1510 = vunpack.c.h.b16 %v855
    %v1511 = vunpack.c.l.b16 %v856
    %v1512 = vunpack.c.h.b16 %v856
    %v1513 = vunpack.c.l.b16 %v857
    %v1514 = vunpack.c.h.b16 %v857
    %v1515 = vunpack.c.l.b16 %v858
    %v1516 = vunpack.c.h.b16 %v858
    %v1517 = vunpack.c.l.b16 %v859
    %v1518 = vunpack.c.h.b16 %v859
    %v1519 = vunpack.c.l.b16 %v860
    %v1520 = vunpack.c.h.b16 %v860
    %v1521 = vunpack.c.l.b16 %v861
    %v1522 = vunpack.c.h.b16 %v861
    %v1523 = vunpack.c.l.b16 %v862
    %v1524 = vunpack.c.h.b16 %v862
    %v1525 = vunpack.c.l.b16 %v863
    %v1526 = vunpack.c.h.b16 %v863
    %v1527 = vunpack.c.l.b16 %v864
    %v1528 = vunpack.c.h.b16 %v864
    %v1529 = vunpack.c.l.b16 %v865
    %v1530 = vunpack.c.h.b16 %v865
    %v1531 = vunpack.c.l.b16 %v866
    %v1532 = vunpack.c.h.b16 %v866
    %v1533 = vunpack.c.l.b16 %v867
    %v1534 = vunpack.c.h.b16 %v867
    %v1535 = vunpack.c.l.b16 %v868
    %v1536 = vunpack.c.h.b16 %v868
    %v1537 = vunpack.c.l.b16 %v869
    %v1538 = vunpack.c.h.b16 %v869
    %v1539 = vunpack.c.l.b16 %v870
    %v1540 = vunpack.c.h.b16 %v870
    %v1541 = vunpack.c.l.b16 %v871
    %v1542 = vunpack.c.h.b16 %v871
    %v1543 = vunpack.c.l.b16 %v872
    %v1544 = vunpack.c.h.b16 %v872
    %v1545 = vunpack.c.l.b16 %v873
    %v1546 = vunpack.c.h.b16 %v873
    %v1547 = vunpack.c.l.b16 %v874
    %v1548 = vunpack.c.h.b16 %v874
    %v1549 = vunpack.c.l.b16 %v875
    %v1550 = vunpack.c.h.b16 %v875
    %v1551 = vunpack.c.l.b16 %v876
    %v1552 = vunpack.c.h.b16 %v876
    %v1553 = vunpack.c.l.b16 %v877
    %v1554 = vunpack.c.h.b16 %v877
    %v1555 = vunpack.c.l.b16 %v878
    %v1556 = vunpack.c.h.b16 %v878
    %v1557 = vunpack.c.l.b16 %v879
    %v1558 = vunpack.c.h.b16 %v879
    %v1559 = vunpack.c.l.b16 %v880
    %v1560 = vunpack.c.h.b16 %v880
    %v1561 = vunpack.c.l.b16 %v881
    %v1562 = vunpack.c.h.b16 %v881
    %v1563 = vunpack.c.l.b16 %v882
    %v1564 = vunpack.c.h.b16 %v882
    %v1565 = vunpack.c.l.b16 %v883
    %v1566 = vunpack.c.h.b16 %v883
    %v1567 = vunpack.c.l.b16 %v884
    %v1568 = vunpack.c.h.b16 %v884
    %v1569 = vunpack.c.l.b16 %v885
    %v1570 = vunpack.c.h.b16 %v885
    %v1571 = vunpack.c.l.b16 %v886
    %v1572 = vunpack.c.h.b16 %v886
    %v1573 = vunpack.c.l.b16 %v887
    %v1574 = vunpack.c.h.b16 %v887
    %v1575 = vunpack.c.l.b16 %v888
    %v1576 = vunpack.c.h.b16 %v888
    %v1577 = vunpack.c.l.b16 %v889
    %v1578 = vunpack.c.h.b16 %v889
    %v1579 = vunpack.c.l.b16 %v890
    %v1580 = vunpack.c.h.b16 %v890
    %v1581 = vunpack.c.l.b16 %v891
    %v1582 = vunpack.c.h.b16 %v891
    %v1583 = vunpack.c.l.b16 %v892
    %v1584 = vunpack.c.h.b16 %v892
    %v1585 = vunpack.c.l.b16 %v893
    %v1586 = vunpack.c.h.b16 %v893
    %v1587 = vunpack.c.l.b16 %v894
    %v1588 = vunpack.c.h.b16 %v894
    %v1589 = vunpack.c.l.b16 %v895
    %v1590 = vunpack.c.h.b16 %v895
    %v1591 = vunpack.c.l.b16 %v896
    %v1592 = vunpack.c.h.b16 %v896
    %v1593 = vunpack.c.l.b16 %v897
    %v1594 = vunpack.c.h.b16 %v897
    %v1595 = vunpack.c.l.b16 %v898
    %v1596 = vunpack.c.h.b16 %v898
    %v1597 = vunpack.c.l.b16 %v899
    %v1598 = vunpack.c.h.b16 %v899
    %v1599 = vunpack.c.l.b16 %v900
    %v1600 = vunpack.c.h.b16 %v900
    %v1601 = vunpack.c.l.b16 %v901
    %v1602 = vunpack.c.h.b16 %v901
    %v1603 = vunpack.c.l.b16 %v902
    %v1604 = vunpack.c.h.b16 %v902
    %v1605 = vunpack.c.l.b16 %v903
    %v1606 = vunpack.c.h.b16 %v903
    %v1607 = vunpack.c.l.b16 %v904
    %v1608 = vunpack.c.h.b16 %v904
    %v1609 = vunpack.c.l.b16 %v905
    %v1610 = vunpack.c.h.b16 %v905
    %v1611 = vunpack.c.l.b16 %v906
    %v1612 = vunpack.c.h.b16 %v906
    %v1613 = vunpack.c.l.b16 %v907
    %v1614 = vunpack.c.h.b16 %v907
    %v1615 = vunpack.c.l.b16 %v908
    %v1616 = vunpack.c.h.b16 %v908
    %v1617 = vunpack.c.l.b16 %v909
    %v1618 = vunpack.c.h.b16 %v909
    %v1619 = vunpack.c.l.b16 %v910
    %v1620 = vunpack.c.h.b16 %v910
    %v1621 = vunpack.c.l.b16 %v911
    %v1622 = vunpack.c.h.b16 %v911
    %v1623 = vunpack.c.l.b16 %v912
    %v1624 = vunpack.c.h.b16 %v912
    %v1625 = vunpack.c.l.b16 %v913
    %v1626 = vunpack.c.h.b16 %v913
    %v1627 = vunpack.c.l.b16 %v914
    %v1628 = vunpack.c.h.b16 %v914
    %v1629 = vunpack.c.l.b16 %v915
    %v1630 = vunpack.c.h.b16 %v915
    %v1631 = vunpack.c.l.b16 %v916
    %v1632 = vunpack.c.h.b16 %v916
    %v1633 = vunpack.c.l.b16 %v917
    %v1634 = vunpack.c.h.b16 %v917
    %v1635 = vunpack.c.l.b16 %v918
    %v1636 = vunpack.c.h.b16 %v918
    %v1637 = vunpack.c.l.b16 %v919
    %v1638 = vunpack.c.h.b16 %v919
    %v1639 = vunpack.c.l.b16 %v920
    %v1640 = vunpack.c.h.b16 %v920
    %v1641 = vunpack.c.l.b16 %v921
    %v1642 = vunpack.c.h.b16 %v921
    %v1643 = vunpack.c.l.b16 %v922
    %v1644 = vunpack.c.h.b16 %v922
    %v1645 = vunpack.c.l.b16 %v923
    %v1646 = vunpack.c.h.b16 %v923
    %v1647 = vunpack.c.l.b16 %v924
    %v1648 = vunpack.c.h.b16 %v924
    %v1649 = vunpack.c.l.b16 %v925
    %v1650 = vunpack.c.h.b16 %v925
    %v1651 = vunpack.c.l.b16 %v926
    %v1652 = vunpack.c.h.b16 %v926
    %v1653 = vunpack.c.l.b16 %v927
    %v1654 = vunpack.c.h.b16 %v927
    %v1655 = vunpack.c.l.b16 %v928
    %v1656 = vunpack.c.h.b16 %v928
    %v1657 = vunpack.c.l.b16 %v929
    %v1658 = vunpack.c.h.b16 %v929
    %v1659 = vunpack.c.l.b16 %v930
    %v1660 = vunpack.c.h.b16 %v930
    %v1661 = vunpack.c.l.b16 %v931
    %v1662 = vunpack.c.h.b16 %v931
    %v1663 = vunpack.c.l.b16 %v932
    %v1664 = vunpack.c.h.b16 %v932
    %v1665 = vunpack.c.l.b16 %v933
    %v1666 = vunpack.c.h.b16 %v933
    %v1667 = vunpack.c.l.b16 %v934
    %v1668 = vunpack.c.h.b16 %v934
    %v1669 = vunpack.c.l.b16 %v935
    %v1670 = vunpack.c.h.b16 %v935
    %v1671 = vunpack.c.l.b16 %v936
    %v1672 = vunpack.c.h.b16 %v936
    %v1673 = vunpack.c.l.b16 %v937
    %v1674 = vunpack.c.h.b16 %v937
    %v1675 = vunpack.c.l.b16 %v938
    %v1676 = vunpack.c.h.b16 %v938
    %v1677 = vunpack.c.l.b16 %v939
    %v1678 = vunpack.c.h.b16 %v939
    %v1679 = vunpack.c.l.b16 %v940
    %v1680 = vunpack.c.h.b16 %v940
    %v1681 = vunpack.c.l.b16 %v941
    %v1682 = vunpack.c.h.b16 %v941
    %v1683 = vunpack.c.l.b16 %v942
    %v1684 = vunpack.c.h.b16 %v942
    %v1685 = vunpack.c.l.b16 %v943
    %v1686 = vunpack.c.h.b16 %v943
    %v1687 = vunpack.c.l.b16 %v944
    %v1688 = vunpack.c.h.b16 %v944
    %v1689 = vunpack.c.l.b16 %v945
    %v1690 = vunpack.c.h.b16 %v945
    %v1691 = vunpack.c.l.b16 %v946
    %v1692 = vunpack.c.h.b16 %v946
    %v1693 = vunpack.c.l.b16 %v947
    %v1694 = vunpack.c.h.b16 %v947
    %v1695 = vunpack.c.l.b16 %v948
    %v1696 = vunpack.c.h.b16 %v948
    %v1697 = vunpack.c.l.b16 %v949
    %v1698 = vunpack.c.h.b16 %v949
    %v1699 = vunpack.c.l.b16 %v950
    %v1700 = vunpack.c.h.b16 %v950
    %v1701 = vunpack.c.l.b16 %v951
    %v1702 = vunpack.c.h.b16 %v951
    %v1703 = vunpack.c.l.b16 %v952
    %v1704 = vunpack.c.h.b16 %v952
    %v1705 = vunpack.c.l.b16 %v953
    %v1706 = vunpack.c.h.b16 %v953
    %v1707 = vunpack.c.l.b16 %v954
    %v1708 = vunpack.c.h.b16 %v954
    %v1709 = vunpack.c.l.b16 %v955
    %v1710 = vunpack.c.h.b16 %v955
    %v1711 = vunpack.c.l.b16 %v956
    %v1712 = vunpack.c.h.b16 %v956
    %v1713 = vunpack.c.l.b16 %v957
    %v1714 = vunpack.c.h.b16 %v957
    %v1715 = vunpack.c.l.b16 %v958
    %v1716 = vunpack.c.h.b16 %v958
    %v1717 = vunpack.c.l.b16 %v959
    %v1718 = vunpack.c.h.b16 %v959
    %v1719 = vunpack.c.l.b16 %v960
    %v1720 = vunpack.c.h.b16 %v960
    %v1721 = vunpack.c.l.b16 %v961
    %v1722 = vunpack.c.h.b16 %v961
    %v1723 = vunpack.c.l.b16 %v962
    %v1724 = vunpack.c.h.b16 %v962
    %v1725 = vunpack.c.l.b16 %v963
    %v1726 = vunpack.c.h.b16 %v963
    %v1727 = vunpack.c.l.b16 %v964
    %v1728 = vunpack.c.h.b16 %v964
    %v1729 = vunpack.c.l.b16 %v965
    %v1730 = vunpack.c.h.b16 %v965
    %v1731 = vunpack.c.l.b16 %v966
    %v1732 = vunpack.c.h.b16 %v966
    %v1733 = vunpack.c.l.b16 %v967
    %v1734 = vunpack.c.h.b16 %v967
    %v1735 = vunpack.c.l.b16 %v968
    %v1736 = vunpack.c.h.b16 %v968
    %v1737 = vunpack.c.l.b16 %v969
    %v1738 = vunpack.c.h.b16 %v969
    %v1739 = vunpack.c.l.b16 %v970
    %v1740 = vunpack.c.h.b16 %v970
    %v1741 = vunpack.c.l.b16 %v971
    %v1742 = vunpack.c.h.b16 %v971
    %v1743 = vunpack.c.l.b16 %v972
    %v1744 = vunpack.c.h.b16 %v972
    %v1745 = vunpack.c.l.b16 %v973
    %v1746 = vunpack.c.h.b16 %v973
    %v1747 = vunpack.c.l.b16 %v974
    %v1748 = vunpack.c.h.b16 %v974
    %v1749 = vunpack.c.l.b16 %v975
    %v1750 = vunpack.c.h.b16 %v975
    %v1751 = vunpack.c.l.b16 %v976
    %v1752 = vunpack.c.h.b16 %v976
    %v1753 = vunpack.c.l.b16 %v977
    %v1754 = vunpack.c.h.b16 %v977
    %v1755 = vunpack.c.l.b16 %v978
    %v1756 = vunpack.c.h.b16 %v978
    %v1757 = vpack.c.b16 %v1249, %v1245
    %v1758 = vpack.c.b16 %v1250, %v1246
    %v1759 = vpack.c.b16 %v1251, %v1247
    %v1760 = vpack.c.b16 %v1252, %v1248
    %v1761 = vpack.c.b16 %v1257, %v1253
    %v1762 = vpack.c.b16 %v1258, %v1254
    %v1763 = vpack.c.b16 %v1259, %v1255
    %v1764 = vpack.c.b16 %v1260, %v1256
    %v1765 = vpack.c.b16 %v1265, %v1261
    %v1766 = vpack.c.b16 %v1266, %v1262
    %v1767 = vpack.c.b16 %v1267, %v1263
    %v1768 = vpack.c.b16 %v1268, %v1264
    %v1769 = vpack.c.b16 %v1273, %v1269
    %v1770 = vpack.c.b16 %v1274, %v1270
    %v1771 = vpack.c.b16 %v1275, %v1271
    %v1772 = vpack.c.b16 %v1276, %v1272
    %v1773 = vpack.c.b16 %v1281, %v1277
    %v1774 = vpack.c.b16 %v1282, %v1278
    %v1775 = vpack.c.b16 %v1283, %v1279
    %v1776 = vpack.c.b16 %v1284, %v1280
    %v1777 = vpack.c.b16 %v1289, %v1285
    %v1778 = vpack.c.b16 %v1290, %v1286
    %v1779 = vpack.c.b16 %v1291, %v1287
    %v1780 = vpack.c.b16 %v1292, %v1288
    %v1781 = vpack.c.b16 %v1297, %v1293
    %v1782 = vpack.c.b16 %v1298, %v1294
    %v1783 = vpack.c.b16 %v1299, %v1295
    %v1784 = vpack.c.b16 %v1300, %v1296
    %v1785 = vpack.c.b16 %v1305, %v1301
    %v1786 = vpack.c.b16 %v1306, %v1302
    %v1787 = vpack.c.b16 %v1307, %v1303
    %v1788 = vpack.c.b16 %v1308, %v1304
    %v1789 = vpack.c.b16 %v1313, %v1309
    %v1790 = vpack.c.b16 %v1314, %v1310
    %v1791 = vpack.c.b16 %v1315, %v1311
    %v1792 = vpack.c.b16 %v1316, %v1312
    %v1793 = vpack.c.b16 %v1321, %v1317
    %v1794 = vpack.c.b16 %v1322, %v1318
    %v1795 = vpack.c.b16 %v1323, %v1319
    %v1796 = vpack.c.b16 %v1324, %v1320
    %v1797 = vpack.c.b16 %v1329, %v1325
    %v1798 = vpack.c.b16 %v1330, %v1326
    %v1799 = vpack.c.b16 %v1331, %v1327
    %v1800 = vpack.c.b16 %v1332, %v1328
    %v1801 = vpack.c.b16 %v1337, %v1333
    %v1802 = vpack.c.b16 %v1338, %v1334
    %v1803 = vpack.c.b16 %v1339, %v1335
    %v1804 = vpack.c.b16 %v1340, %v1336
    %v1805 = vpack.c.b16 %v1345, %v1341
    %v1806 = vpack.c.b16 %v1346, %v1342
    %v1807 = vpack.c.b16 %v1347, %v1343
    %v1808 = vpack.c.b16 %v1348, %v1344
    %v1809 = vpack.c.b16 %v1353, %v1349
    %v1810 = vpack.c.b16 %v1354, %v1350
    %v1811 = vpack.c.b16 %v1355, %v1351
    %v1812 = vpack.c.b16 %v1356, %v1352
    %v1813 = vpack.c.b16 %v1361, %v1357
    %v1814 = vpack.c.b16 %v1362, %v1358
    %v1815 = vpack.c.b16 %v1363, %v1359
    %v1816 = vpack.c.b16 %v1364, %v1360
    %v1817 = vpack.c.b16 %v1369, %v1365
    %v1818 = vpack.c.b16 %v1370, %v1366
    %v1819 = vpack.c.b16 %v1371, %v1367
    %v1820 = vpack.c.b16 %v1372, %v1368
    %v1821 = vpack.c.b16 %v1377, %v1373
    %v1822 = vpack.c.b16 %v1378, %v1374
    %v1823 = vpack.c.b16 %v1379, %v1375
    %v1824 = vpack.c.b16 %v1380, %v1376
    %v1825 = vpack.c.b16 %v1385, %v1381
    %v1826 = vpack.c.b16 %v1386, %v1382
    %v1827 = vpack.c.b16 %v1387, %v1383
    %v1828 = vpack.c.b16 %v1388, %v1384
    %v1829 = vpack.c.b16 %v1393, %v1389
    %v1830 = vpack.c.b16 %v1394, %v1390
    %v1831 = vpack.c.b16 %v1395, %v1391
    %v1832 = vpack.c.b16 %v1396, %v1392
    %v1833 = vpack.c.b16 %v1401, %v1397
    %v1834 = vpack.c.b16 %v1402, %v1398
    %v1835 = vpack.c.b16 %v1403, %v1399
    %v1836 = vpack.c.b16 %v1404, %v1400
    %v1837 = vpack.c.b16 %v1409, %v1405
    %v1838 = vpack.c.b16 %v1410, %v1406
    %v1839 = vpack.c.b16 %v1411, %v1407
    %v1840 = vpack.c.b16 %v1412, %v1408
    %v1841 = vpack.c.b16 %v1417, %v1413
    %v1842 = vpack.c.b16 %v1418, %v1414
    %v1843 = vpack.c.b16 %v1419, %v1415
    %v1844 = vpack.c.b16 %v1420, %v1416
    %v1845 = vpack.c.b16 %v1425, %v1421
    %v1846 = vpack.c.b16 %v1426, %v1422
    %v1847 = vpack.c.b16 %v1427, %v1423
    %v1848 = vpack.c.b16 %v1428, %v1424
    %v1849 = vpack.c.b16 %v1433, %v1429
    %v1850 = vpack.c.b16 %v1434, %v1430
    %v1851 = vpack.c.b16 %v1435, %v1431
    %v1852 = vpack.c.b16 %v1436, %v1432
    %v1853 = vpack.c.b16 %v1441, %v1437
    %v1854 = vpack.c.b16 %v1442, %v1438
    %v1855 = vpack.c.b16 %v1443, %v1439
    %v1856 = vpack.c.b16 %v1444, %v1440
    %v1857 = vpack.c.b16 %v1449, %v1445
    %v1858 = vpack.c.b16 %v1450, %v1446
    %v1859 = vpack.c.b16 %v1451, %v1447
    %v1860 = vpack.c.b16 %v1452, %v1448
    %v1861 = vpack.c.b16 %v1457, %v1453
    %v1862 = vpack.c.b16 %v1458, %v1454
    %v1863 = vpack.c.b16 %v1459, %v1455
    %v1864 = vpack.c.b16 %v1460, %v1456
    %v1865 = vpack.c.b16 %v1465, %v1461
    %v1866 = vpack.c.b16 %v1466, %v1462
    %v1867 = vpack.c.b16 %v1467, %v1463
    %v1868 = vpack.c.b16 %v1468, %v1464
    %v1869 = vpack.c.b16 %v1473, %v1469
    %v1870 = vpack.c.b16 %v1474, %v1470
    %v1871 = vpack.c.b16 %v1475, %v1471
    %v1872 = vpack.c.b16 %v1476, %v1472
    %v1873 = vpack.c.b16 %v1481, %v1477
    %v1874 = vpack.c.b16 %v1482, %v1478
    %v1875 = vpack.c.b16 %v1483, %v1479
    %v1876 = vpack.c.b16 %v1484, %v1480
    %v1877 = vpack.c.b16 %v1489, %v1485
    %v1878 = vpack.c.b16 %v1490, %v1486
    %v1879 = vpack.c.b16 %v1491, %v1487
    %v1880 = vpack.c.b16 %v1492, %v1488
    %v1881 = vpack.c.b16 %v1497, %v1493
    %v1882 = vpack.c.b16 %v1498, %v1494
    %v1883 = vpack.c.b16 %v1499, %v1495
    %v1884 = vpack.c.b16 %v1500, %v1496
    %v1885 = vpack.c.b16 %v1505, %v1501
    %v1886 = vpack.c.b16 %v1506, %v1502
    %v1887 = vpack.c.b16 %v1507, %v1503
    %v1888 = vpack.c.b16 %v1508, %v1504
    %v1889 = vpack.c.b16 %v1513, %v1509
    %v1890 = vpack.c.b16 %v1514, %v1510
    %v1891 = vpack.c.b16 %v1515, %v1511
    %v1892 = vpack.c.b16 %v1516, %v1512
    %v1893 = vpack.c.b16 %v1521, %v1517
    %v1894 = vpack.c.b16 %v1522, %v1518
    %v1895 = vpack.c.b16 %v1523, %v1519
    %v1896 = vpack.c.b16 %v1524, %v1520
    %v1897 = vpack.c.b16 %v1529, %v1525
    %v1898 = vpack.c.b16 %v1530, %v1526
    %v1899 = vpack.c.b16 %v1531, %v1527
    %v1900 = vpack.c.b16 %v1532, %v1528
    %v1901 = vpack.c.b16 %v1537, %v1533
    %v1902 = vpack.c.b16 %v1538, %v1534
    %v1903 = vpack.c.b16 %v1539, %v1535
    %v1904 = vpack.c.b16 %v1540, %v1536
    %v1905 = vpack.c.b16 %v1545, %v1541
    %v1906 = vpack.c.b16 %v1546, %v1542
    %v1907 = vpack.c.b16 %v1547, %v1543
    %v1908 = vpack.c.b16 %v1548, %v1544
    %v1909 = vpack.c.b16 %v1553, %v1549
    %v1910 = vpack.c.b16 %v1554, %v1550
    %v1911 = vpack.c.b16 %v1555, %v1551
    %v1912 = vpack.c.b16 %v1556, %v1552
    %v1913 = vpack.c.b16 %v1561, %v1557
    %v1914 = vpack.c.b16 %v1562, %v1558
    %v1915 = vpack.c.b16 %v1563, %v1559
    %v1916 = vpack.c.b16 %v1564, %v1560
    %v1917 = vpack.c.b16 %v1569, %v1565
    %v1918 = vpack.c.b16 %v1570, %v1566
    %v1919 = vpack.c.b16 %v1571, %v1567
    %v1920 = vpack.c.b16 %v1572, %v1568
    %v1921 = vpack.c.b16 %v1577, %v1573
    %v1922 = vpack.c.b16 %v1578, %v1574
    %v1923 = vpack.c.b16 %v1579, %v1575
    %v1924 = vpack.c.b16 %v1580, %v1576
    %v1925 = vpack.c.b16 %v1585, %v1581
    %v1926 = vpack.c.b16 %v1586, %v1582
    %v1927 = vpack.c.b16 %v1587, %v1583
    %v1928 = vpack.c.b16 %v1588, %v1584
    %v1929 = vpack.c.b16 %v1593, %v1589
    %v1930 = vpack.c.b16 %v1594, %v1590
    %v1931 = vpack.c.b16 %v1595, %v1591
    %v1932 = vpack.c.b16 %v1596, %v1592
    %v1933 = vpack.c.b16 %v1601, %v1597
    %v1934 = vpack.c.b16 %v1602, %v1598
    %v1935 = vpack.c.b16 %v1603, %v1599
    %v1936 = vpack.c.b16 %v1604, %v1600
    %v1937 = vpack.c.b16 %v1609, %v1605
    %v1938 = vpack.c.b16 %v1610, %v1606
    %v1939 = vpack.c.b16 %v1611, %v1607
    %v1940 = vpack.c.b16 %v1612, %v1608
    %v1941 = vpack.c.b16 %v1617, %v1613
    %v1942 = vpack.c.b16 %v1618, %v1614
    %v1943 = vpack.c.b16 %v1619, %v1615
    %v1944 = vpack.c.b16 %v1620, %v1616
    %v1945 = vpack.c.b16 %v1625, %v1621
    %v1946 = vpack.c.b16 %v1626, %v1622
    %v1947 = vpack.c.b16 %v1627, %v1623
    %v1948 = vpack.c.b16 %v1628, %v1624
    %v1949 = vpack.c.b16 %v1633, %v1629
    %v1950 = vpack.c.b16 %v1634, %v1630
    %v1951 = vpack.c.b16 %v1635, %v1631
    %v1952 = vpack.c.b16 %v1636, %v1632
    %v1953 = vpack.c.b16 %v1641, %v1637
    %v1954 = vpack.c.b16 %v1642, %v1638
    %v1955 = vpack.c.b16 %v1643, %v1639
    %v1956 = vpack.c.b16 %v1644, %v1640
    %v1957 = vpack.c.b16 %v1649, %v1645
    %v1958 = vpack.c.b16 %v1650, %v1646
    %v1959 = vpack.c.b16 %v1651, %v1647
    %v1960 = vpack.c.b16 %v1652, %v1648
    %v1961 = vpack.c.b16 %v1657, %v1653
    %v1962 = vpack.c.b16 %v1658, %v1654
    %v1963 = vpack.c.b16 %v1659, %v1655
    %v1964 = vpack.c.b16 %v1660, %v1656
    %v1965 = vpack.c.b16 %v1665, %v1661
    %v1966 = vpack.c.b16 %v1666, %v1662
    %v1967 = vpack.c.b16 %v1667, %v1663
    %v1968 = vpack.c.b16 %v1668, %v1664
    %v1969 = vpack.c.b16 %v1673, %v1669
    %v1970 = vpack.c.b16 %v1674, %v1670
    %v1971 = vpack.c.b16 %v1675, %v1671
    %v1972 = vpack.c.b16 %v1676, %v1672
    %v1973 = vpack.c.b16 %v1681, %v1677
    %v1974 = vpack.c.b16 %v1682, %v1678
    %v1975 = vpack.c.b16 %v1683, %v1679
    %v1976 = vpack.c.b16 %v1684, %v1680
    %v1977 = vpack.c.b16 %v1689, %v1685
    %v1978 = vpack.c.b16 %v1690, %v1686
    %v1979 = vpack.c.b16 %v1691, %v1687
    %v1980 = vpack.c.b16 %v1692, %v1688
    %v1981 = vpack.c.b16 %v1697, %v1693
    %v1982 = vpack.c.b16 %v1698, %v1694
    %v1983 = vpack.c.b16 %v1699, %v1695
    %v1984 = vpack.c.b16 %v1700, %v1696
    %v1985 = vpack.c.b16 %v1705, %v1701
    %v1986 = vpack.c.b16 %v1706, %v1702
    %v1987 = vpack.c.b16 %v1707, %v1703
    %v1988 = vpack.c.b16 %v1708, %v1704
    %v1989 = vpack.c.b16 %v1713, %v1709
    %v1990 = vpack.c.b16 %v1714, %v1710
    %v1991 = vpack.c.b16 %v1715, %v1711
    %v1992 = vpack.c.b16 %v1716, %v1712
    %v1993 = vpack.c.b16 %v1721, %v1717
    %v1994 = vpack.c.b16 %v1722, %v1718
    %v1995 = vpack.c.b16 %v1723, %v1719
    %v1996 = vpack.c.b16 %v1724, %v1720
    %v1997 = vpack.c.b16 %v1729, %v1725
    %v1998 = vpack.c.b16 %v1730, %v1726
    %v1999 = vpack.c.b16 %v1731, %v1727
    %v2000 = vpack.c.b16 %v1732, %v1728
    %v2001 = vpack.c.b16 %v1737, %v1733
    %v2002 = vpack.c.b16 %v1738, %v1734
    %v2003 = vpack.c.b16 %v1739, %v1735
    %v2004 = vpack.c.b16 %v1740, %v1736
    %v2005 = vpack.c.b16 %v1745, %v1741
    %v2006 = vpack.c.b16 %v1746, %v1742
    %v2007 = vpack.c.b16 %v1747, %v1743
    %v2008 = vpack.c.b16 %v1748, %v1744
    %v2009 = vpack.c.b16 %v1753, %v1749
    %v2010 = vpack.c.b16 %v1754, %v1750
    %v2011 = vpack.c.b16 %v1755, %v1751
    %v2012 = vpack.c.b16 %v1756, %v1752
    %2269 = vmatpush.bf16.msra.mxu0 %v1785
    %2270 = vmatpush.bf16.msra.mxu0 %v1781
    %2271 = vmatpush.bf16.msra.mxu0 %v1777
    %2272 = vmatpush.bf16.msra.mxu0 %v1773
    %2273 = vmatpush.bf16.msra.mxu0 %v1769
    %2274 = vmatpush.bf16.msra.mxu0 %v1765
    %2275 = vmatpush.bf16.msra.mxu0 %v1761
    %2276 = vmatpush.bf16.msra.mxu0 %v1757
    %2277 = vmatmul.bf16.gmra.mxu0 %v715
    %v2278 = vpop.f32.mrf.mxu0
    %v2279 = vadd.f32 %v981, %v2278
    %v2280 = vpop.f32.mrf.mxu0
    %2281 = vdwg.mxu0
    %2282 = vmatpush.bf16.msra.mxu0 %v1817
    %2283 = vmatpush.bf16.msra.mxu0 %v1813
    %2284 = vmatpush.bf16.msra.mxu0 %v1809
    %2285 = vmatpush.bf16.msra.mxu0 %v1805
    %2286 = vmatpush.bf16.msra.mxu0 %v1801
    %2287 = vmatpush.bf16.msra.mxu0 %v1797
    %2288 = vmatpush.bf16.msra.mxu0 %v1793
    %2289 = vmatpush.bf16.msra.mxu0 %v1789
    %2290 = vmatmul.bf16.gmra.mxu0 %v716
    %v2291 = vpop.f32.mrf.mxu0
    %v2292 = vadd.f32 %v2279, %v2291
    %v2293 = vpop.f32.mrf.mxu0
    %2294 = vdwg.mxu0
    %2295 = vmatpush.bf16.msra.mxu0 %v1849
    %2296 = vmatpush.bf16.msra.mxu0 %v1845
    %2297 = vmatpush.bf16.msra.mxu0 %v1841
    %2298 = vmatpush.bf16.msra.mxu0 %v1837
    %2299 = vmatpush.bf16.msra.mxu0 %v1833
    %2300 = vmatpush.bf16.msra.mxu0 %v1829
    %2301 = vmatpush.bf16.msra.mxu0 %v1825
    %2302 = vmatpush.bf16.msra.mxu0 %v1821
    %2303 = vmatmul.bf16.gmra.mxu0 %v717
    %v2304 = vpop.f32.mrf.mxu0
    %v2305 = vadd.f32 %v2292, %v2304
    %v2306 = vpop.f32.mrf.mxu0
    %2307 = vdwg.mxu0
    %2308 = vmatpush.bf16.msra.mxu0 %v1881
    %2309 = vmatpush.bf16.msra.mxu0 %v1877
    %2310 = vmatpush.bf16.msra.mxu0 %v1873
    %2311 = vmatpush.bf16.msra.mxu0 %v1869
    %2312 = vmatpush.bf16.msra.mxu0 %v1865
    %2313 = vmatpush.bf16.msra.mxu0 %v1861
    %2314 = vmatpush.bf16.msra.mxu0 %v1857
    %2315 = vmatpush.bf16.msra.mxu0 %v1853
    %2316 = vmatmul.bf16.gmra.mxu0 %v718
    %v2317 = vpop.f32.mrf.mxu0
    %v2318 = vadd.f32 %v2305, %v2317
    %v2319 = vpop.f32.mrf.mxu0
    %2320 = vdwg.mxu0
    %2321 = vmatpush.bf16.msra.mxu0 %v1913
    %2322 = vmatpush.bf16.msra.mxu0 %v1909
    %2323 = vmatpush.bf16.msra.mxu0 %v1905
    %2324 = vmatpush.bf16.msra.mxu0 %v1901
    %2325 = vmatpush.bf16.msra.mxu0 %v1897
    %2326 = vmatpush.bf16.msra.mxu0 %v1893
    %2327 = vmatpush.bf16.msra.mxu0 %v1889
    %2328 = vmatpush.bf16.msra.mxu0 %v1885
    %2329 = vmatmul.bf16.gmra.mxu0 %v719
    %v2330 = vpop.f32.mrf.mxu0
    %v2331 = vadd.f32 %v2318, %v2330
    %v2332 = vpop.f32.mrf.mxu0
    %2333 = vdwg.mxu0
    %2334 = vmatpush.bf16.msra.mxu0 %v1945
    %2335 = vmatpush.bf16.msra.mxu0 %v1941
    %2336 = vmatpush.bf16.msra.mxu0 %v1937
    %2337 = vmatpush.bf16.msra.mxu0 %v1933
    %2338 = vmatpush.bf16.msra.mxu0 %v1929
    %2339 = vmatpush.bf16.msra.mxu0 %v1925
    %2340 = vmatpush.bf16.msra.mxu0 %v1921
    %2341 = vmatpush.bf16.msra.mxu0 %v1917
    %2342 = vmatmul.bf16.gmra.mxu0 %v720
    %v2343 = vpop.f32.mrf.mxu0
    %v2344 = vadd.f32 %v2331, %v2343
    %v2345 = vpop.f32.mrf.mxu0
    %2346 = vdwg.mxu0
    %2347 = vmatpush.bf16.msra.mxu0 %v1977
    %2348 = vmatpush.bf16.msra.mxu0 %v1973
    %2349 = vmatpush.bf16.msra.mxu0 %v1969
    %2350 = vmatpush.bf16.msra.mxu0 %v1965
    %2351 = vmatpush.bf16.msra.mxu0 %v1961
    %2352 = vmatpush.bf16.msra.mxu0 %v1957
    %2353 = vmatpush.bf16.msra.mxu0 %v1953
    %2354 = vmatpush.bf16.msra.mxu0 %v1949
    %2355 = vmatmul.bf16.gmra.mxu0 %v721
    %v2356 = vpop.f32.mrf.mxu0
    %v2357 = vadd.f32 %v2344, %v2356
    %v2358 = vpop.f32.mrf.mxu0
    %2359 = vdwg.mxu0
    %2360 = vmatpush.bf16.msra.mxu0 %v2009
    %2361 = vmatpush.bf16.msra.mxu0 %v2005
    %2362 = vmatpush.bf16.msra.mxu0 %v2001
    %2363 = vmatpush.bf16.msra.mxu0 %v1997
    %2364 = vmatpush.bf16.msra.mxu0 %v1993
    %2365 = vmatpush.bf16.msra.mxu0 %v1989
    %2366 = vmatpush.bf16.msra.mxu0 %v1985
    %2367 = vmatpush.bf16.msra.mxu0 %v1981
    %2368 = vmatmul.bf16.gmra.mxu0 %v722
    %v2369 = vpop.f32.mrf.mxu0
    %v2370 = vadd.f32 %v2357, %v2369
    %v2371 = vpop.f32.mrf.mxu0
    %2372 = vdwg.mxu0
    %2373 = vmatpush.bf16.msra.mxu0 %v1786
    %2374 = vmatpush.bf16.msra.mxu0 %v1782
    %2375 = vmatpush.bf16.msra.mxu0 %v1778
    %2376 = vmatpush.bf16.msra.mxu0 %v1774
    %2377 = vmatpush.bf16.msra.mxu0 %v1770
    %2378 = vmatpush.bf16.msra.mxu0 %v1766
    %2379 = vmatpush.bf16.msra.mxu0 %v1762
    %2380 = vmatpush.bf16.msra.mxu0 %v1758
    %2381 = vmatmul.bf16.gmra.mxu0 %v715
    %v2382 = vpop.f32.mrf.mxu0
    %v2383 = vadd.f32 %v982, %v2382
    %v2384 = vpop.f32.mrf.mxu0
    %2385 = vdwg.mxu0
    %2386 = vmatpush.bf16.msra.mxu0 %v1818
    %2387 = vmatpush.bf16.msra.mxu0 %v1814
    %2388 = vmatpush.bf16.msra.mxu0 %v1810
    %2389 = vmatpush.bf16.msra.mxu0 %v1806
    %2390 = vmatpush.bf16.msra.mxu0 %v1802
    %2391 = vmatpush.bf16.msra.mxu0 %v1798
    %2392 = vmatpush.bf16.msra.mxu0 %v1794
    %2393 = vmatpush.bf16.msra.mxu0 %v1790
    %2394 = vmatmul.bf16.gmra.mxu0 %v716
    %v2395 = vpop.f32.mrf.mxu0
    %v2396 = vadd.f32 %v2383, %v2395
    %v2397 = vpop.f32.mrf.mxu0
    %2398 = vdwg.mxu0
    %2399 = vmatpush.bf16.msra.mxu0 %v1850
    %2400 = vmatpush.bf16.msra.mxu0 %v1846
    %2401 = vmatpush.bf16.msra.mxu0 %v1842
    %2402 = vmatpush.bf16.msra.mxu0 %v1838
    %2403 = vmatpush.bf16.msra.mxu0 %v1834
    %2404 = vmatpush.bf16.msra.mxu0 %v1830
    %2405 = vmatpush.bf16.msra.mxu0 %v1826
    %2406 = vmatpush.bf16.msra.mxu0 %v1822
    %2407 = vmatmul.bf16.gmra.mxu0 %v717
    %v2408 = vpop.f32.mrf.mxu0
    %v2409 = vadd.f32 %v2396, %v2408
    %v2410 = vpop.f32.mrf.mxu0
    %2411 = vdwg.mxu0
    %2412 = vmatpush.bf16.msra.mxu0 %v1882
    %2413 = vmatpush.bf16.msra.mxu0 %v1878
    %2414 = vmatpush.bf16.msra.mxu0 %v1874
    %2415 = vmatpush.bf16.msra.mxu0 %v1870
    %2416 = vmatpush.bf16.msra.mxu0 %v1866
    %2417 = vmatpush.bf16.msra.mxu0 %v1862
    %2418 = vmatpush.bf16.msra.mxu0 %v1858
    %2419 = vmatpush.bf16.msra.mxu0 %v1854
    %2420 = vmatmul.bf16.gmra.mxu0 %v718
    %v2421 = vpop.f32.mrf.mxu0
    %v2422 = vadd.f32 %v2409, %v2421
    %v2423 = vpop.f32.mrf.mxu0
    %2424 = vdwg.mxu0
    %2425 = vmatpush.bf16.msra.mxu0 %v1914
    %2426 = vmatpush.bf16.msra.mxu0 %v1910
    %2427 = vmatpush.bf16.msra.mxu0 %v1906
    %2428 = vmatpush.bf16.msra.mxu0 %v1902
    %2429 = vmatpush.bf16.msra.mxu0 %v1898
    %2430 = vmatpush.bf16.msra.mxu0 %v1894
    %2431 = vmatpush.bf16.msra.mxu0 %v1890
    %2432 = vmatpush.bf16.msra.mxu0 %v1886
    %2433 = vmatmul.bf16.gmra.mxu0 %v719
    %v2434 = vpop.f32.mrf.mxu0
    %v2435 = vadd.f32 %v2422, %v2434
    %v2436 = vpop.f32.mrf.mxu0
    %2437 = vdwg.mxu0
    %2438 = vmatpush.bf16.msra.mxu0 %v1946
    %2439 = vmatpush.bf16.msra.mxu0 %v1942
    %2440 = vmatpush.bf16.msra.mxu0 %v1938
    %2441 = vmatpush.bf16.msra.mxu0 %v1934
    %2442 = vmatpush.bf16.msra.mxu0 %v1930
    %2443 = vmatpush.bf16.msra.mxu0 %v1926
    %2444 = vmatpush.bf16.msra.mxu0 %v1922
    %2445 = vmatpush.bf16.msra.mxu0 %v1918
    %2446 = vmatmul.bf16.gmra.mxu0 %v720
    %v2447 = vpop.f32.mrf.mxu0
    %v2448 = vadd.f32 %v2435, %v2447
    %v2449 = vpop.f32.mrf.mxu0
    %2450 = vdwg.mxu0
    %2451 = vmatpush.bf16.msra.mxu0 %v1978
    %2452 = vmatpush.bf16.msra.mxu0 %v1974
    %2453 = vmatpush.bf16.msra.mxu0 %v1970
    %2454 = vmatpush.bf16.msra.mxu0 %v1966
    %2455 = vmatpush.bf16.msra.mxu0 %v1962
    %2456 = vmatpush.bf16.msra.mxu0 %v1958
    %2457 = vmatpush.bf16.msra.mxu0 %v1954
    %2458 = vmatpush.bf16.msra.mxu0 %v1950
    %2459 = vmatmul.bf16.gmra.mxu0 %v721
    %v2460 = vpop.f32.mrf.mxu0
    %v2461 = vadd.f32 %v2448, %v2460
    %v2462 = vpop.f32.mrf.mxu0
    %2463 = vdwg.mxu0
    %2464 = vmatpush.bf16.msra.mxu0 %v2010
    %2465 = vmatpush.bf16.msra.mxu0 %v2006
    %2466 = vmatpush.bf16.msra.mxu0 %v2002
    %2467 = vmatpush.bf16.msra.mxu0 %v1998
    %2468 = vmatpush.bf16.msra.mxu0 %v1994
    %2469 = vmatpush.bf16.msra.mxu0 %v1990
    %2470 = vmatpush.bf16.msra.mxu0 %v1986
    %2471 = vmatpush.bf16.msra.mxu0 %v1982
    %2472 = vmatmul.bf16.gmra.mxu0 %v722
    %v2473 = vpop.f32.mrf.mxu0
    %v2474 = vadd.f32 %v2461, %v2473
    %v2475 = vpop.f32.mrf.mxu0
    %2476 = vdwg.mxu0
    %2477 = vmatpush.bf16.msra.mxu0 %v1787
    %2478 = vmatpush.bf16.msra.mxu0 %v1783
    %2479 = vmatpush.bf16.msra.mxu0 %v1779
    %2480 = vmatpush.bf16.msra.mxu0 %v1775
    %2481 = vmatpush.bf16.msra.mxu0 %v1771
    %2482 = vmatpush.bf16.msra.mxu0 %v1767
    %2483 = vmatpush.bf16.msra.mxu0 %v1763
    %2484 = vmatpush.bf16.msra.mxu0 %v1759
    %2485 = vmatmul.bf16.gmra.mxu0 %v715
    %v2486 = vpop.f32.mrf.mxu0
    %v2487 = vadd.f32 %v983, %v2486
    %v2488 = vpop.f32.mrf.mxu0
    %2489 = vdwg.mxu0
    %2490 = vmatpush.bf16.msra.mxu0 %v1819
    %2491 = vmatpush.bf16.msra.mxu0 %v1815
    %2492 = vmatpush.bf16.msra.mxu0 %v1811
    %2493 = vmatpush.bf16.msra.mxu0 %v1807
    %2494 = vmatpush.bf16.msra.mxu0 %v1803
    %2495 = vmatpush.bf16.msra.mxu0 %v1799
    %2496 = vmatpush.bf16.msra.mxu0 %v1795
    %2497 = vmatpush.bf16.msra.mxu0 %v1791
    %2498 = vmatmul.bf16.gmra.mxu0 %v716
    %v2499 = vpop.f32.mrf.mxu0
    %v2500 = vadd.f32 %v2487, %v2499
    %v2501 = vpop.f32.mrf.mxu0
    %2502 = vdwg.mxu0
    %2503 = vmatpush.bf16.msra.mxu0 %v1851
    %2504 = vmatpush.bf16.msra.mxu0 %v1847
    %2505 = vmatpush.bf16.msra.mxu0 %v1843
    %2506 = vmatpush.bf16.msra.mxu0 %v1839
    %2507 = vmatpush.bf16.msra.mxu0 %v1835
    %2508 = vmatpush.bf16.msra.mxu0 %v1831
    %2509 = vmatpush.bf16.msra.mxu0 %v1827
    %2510 = vmatpush.bf16.msra.mxu0 %v1823
    %2511 = vmatmul.bf16.gmra.mxu0 %v717
    %v2512 = vpop.f32.mrf.mxu0
    %v2513 = vadd.f32 %v2500, %v2512
    %v2514 = vpop.f32.mrf.mxu0
    %2515 = vdwg.mxu0
    %2516 = vmatpush.bf16.msra.mxu0 %v1883
    %2517 = vmatpush.bf16.msra.mxu0 %v1879
    %2518 = vmatpush.bf16.msra.mxu0 %v1875
    %2519 = vmatpush.bf16.msra.mxu0 %v1871
    %2520 = vmatpush.bf16.msra.mxu0 %v1867
    %2521 = vmatpush.bf16.msra.mxu0 %v1863
    %2522 = vmatpush.bf16.msra.mxu0 %v1859
    %2523 = vmatpush.bf16.msra.mxu0 %v1855
    %2524 = vmatmul.bf16.gmra.mxu0 %v718
    %v2525 = vpop.f32.mrf.mxu0
    %v2526 = vadd.f32 %v2513, %v2525
    %v2527 = vpop.f32.mrf.mxu0
    %2528 = vdwg.mxu0
    %2529 = vmatpush.bf16.msra.mxu0 %v1915
    %2530 = vmatpush.bf16.msra.mxu0 %v1911
    %2531 = vmatpush.bf16.msra.mxu0 %v1907
    %2532 = vmatpush.bf16.msra.mxu0 %v1903
    %2533 = vmatpush.bf16.msra.mxu0 %v1899
    %2534 = vmatpush.bf16.msra.mxu0 %v1895
    %2535 = vmatpush.bf16.msra.mxu0 %v1891
    %2536 = vmatpush.bf16.msra.mxu0 %v1887
    %2537 = vmatmul.bf16.gmra.mxu0 %v719
    %v2538 = vpop.f32.mrf.mxu0
    %v2539 = vadd.f32 %v2526, %v2538
    %v2540 = vpop.f32.mrf.mxu0
    %2541 = vdwg.mxu0
    %2542 = vmatpush.bf16.msra.mxu0 %v1947
    %2543 = vmatpush.bf16.msra.mxu0 %v1943
    %2544 = vmatpush.bf16.msra.mxu0 %v1939
    %2545 = vmatpush.bf16.msra.mxu0 %v1935
    %2546 = vmatpush.bf16.msra.mxu0 %v1931
    %2547 = vmatpush.bf16.msra.mxu0 %v1927
    %2548 = vmatpush.bf16.msra.mxu0 %v1923
    %2549 = vmatpush.bf16.msra.mxu0 %v1919
    %2550 = vmatmul.bf16.gmra.mxu0 %v720
    %v2551 = vpop.f32.mrf.mxu0
    %v2552 = vadd.f32 %v2539, %v2551
    %v2553 = vpop.f32.mrf.mxu0
    %2554 = vdwg.mxu0
    %2555 = vmatpush.bf16.msra.mxu0 %v1979
    %2556 = vmatpush.bf16.msra.mxu0 %v1975
    %2557 = vmatpush.bf16.msra.mxu0 %v1971
    %2558 = vmatpush.bf16.msra.mxu0 %v1967
    %2559 = vmatpush.bf16.msra.mxu0 %v1963
    %2560 = vmatpush.bf16.msra.mxu0 %v1959
    %2561 = vmatpush.bf16.msra.mxu0 %v1955
    %2562 = vmatpush.bf16.msra.mxu0 %v1951
    %2563 = vmatmul.bf16.gmra.mxu0 %v721
    %v2564 = vpop.f32.mrf.mxu0
    %v2565 = vadd.f32 %v2552, %v2564
    %v2566 = vpop.f32.mrf.mxu0
    %2567 = vdwg.mxu0
    %2568 = vmatpush.bf16.msra.mxu0 %v2011
    %2569 = vmatpush.bf16.msra.mxu0 %v2007
    %2570 = vmatpush.bf16.msra.mxu0 %v2003
    %2571 = vmatpush.bf16.msra.mxu0 %v1999
    %2572 = vmatpush.bf16.msra.mxu0 %v1995
    %2573 = vmatpush.bf16.msra.mxu0 %v1991
    %2574 = vmatpush.bf16.msra.mxu0 %v1987
    %2575 = vmatpush.bf16.msra.mxu0 %v1983
    %2576 = vmatmul.bf16.gmra.mxu0 %v722
    %v2577 = vpop.f32.mrf.mxu0
    %v2578 = vadd.f32 %v2565, %v2577
    %v2579 = vpop.f32.mrf.mxu0
    %2580 = vdwg.mxu0
    %2581 = vmatpush.bf16.msra.mxu0 %v1788
    %2582 = vmatpush.bf16.msra.mxu0 %v1784
    %2583 = vmatpush.bf16.msra.mxu0 %v1780
    %2584 = vmatpush.bf16.msra.mxu0 %v1776
    %2585 = vmatpush.bf16.msra.mxu0 %v1772
    %2586 = vmatpush.bf16.msra.mxu0 %v1768
    %2587 = vmatpush.bf16.msra.mxu0 %v1764
    %2588 = vmatpush.bf16.msra.mxu0 %v1760
    %2589 = vmatmul.bf16.gmra.mxu0 %v715
    %v2590 = vpop.f32.mrf.mxu0
    %v2591 = vadd.f32 %v984, %v2590
    %v2592 = vpop.f32.mrf.mxu0
    %2593 = vdwg.mxu0
    %2594 = vmatpush.bf16.msra.mxu0 %v1820
    %2595 = vmatpush.bf16.msra.mxu0 %v1816
    %2596 = vmatpush.bf16.msra.mxu0 %v1812
    %2597 = vmatpush.bf16.msra.mxu0 %v1808
    %2598 = vmatpush.bf16.msra.mxu0 %v1804
    %2599 = vmatpush.bf16.msra.mxu0 %v1800
    %2600 = vmatpush.bf16.msra.mxu0 %v1796
    %2601 = vmatpush.bf16.msra.mxu0 %v1792
    %2602 = vmatmul.bf16.gmra.mxu0 %v716
    %v2603 = vpop.f32.mrf.mxu0
    %v2604 = vadd.f32 %v2591, %v2603
    %v2605 = vpop.f32.mrf.mxu0
    %2606 = vdwg.mxu0
    %2607 = vmatpush.bf16.msra.mxu0 %v1852
    %2608 = vmatpush.bf16.msra.mxu0 %v1848
    %2609 = vmatpush.bf16.msra.mxu0 %v1844
    %2610 = vmatpush.bf16.msra.mxu0 %v1840
    %2611 = vmatpush.bf16.msra.mxu0 %v1836
    %2612 = vmatpush.bf16.msra.mxu0 %v1832
    %2613 = vmatpush.bf16.msra.mxu0 %v1828
    %2614 = vmatpush.bf16.msra.mxu0 %v1824
    %2615 = vmatmul.bf16.gmra.mxu0 %v717
    %v2616 = vpop.f32.mrf.mxu0
    %v2617 = vadd.f32 %v2604, %v2616
    %v2618 = vpop.f32.mrf.mxu0
    %2619 = vdwg.mxu0
    %2620 = vmatpush.bf16.msra.mxu0 %v1884
    %2621 = vmatpush.bf16.msra.mxu0 %v1880
    %2622 = vmatpush.bf16.msra.mxu0 %v1876
    %2623 = vmatpush.bf16.msra.mxu0 %v1872
    %2624 = vmatpush.bf16.msra.mxu0 %v1868
    %2625 = vmatpush.bf16.msra.mxu0 %v1864
    %2626 = vmatpush.bf16.msra.mxu0 %v1860
    %2627 = vmatpush.bf16.msra.mxu0 %v1856
    %2628 = vmatmul.bf16.gmra.mxu0 %v718
    %v2629 = vpop.f32.mrf.mxu0
    %v2630 = vadd.f32 %v2617, %v2629
    %v2631 = vpop.f32.mrf.mxu0
    %2632 = vdwg.mxu0
    %2633 = vmatpush.bf16.msra.mxu0 %v1916
    %2634 = vmatpush.bf16.msra.mxu0 %v1912
    %2635 = vmatpush.bf16.msra.mxu0 %v1908
    %2636 = vmatpush.bf16.msra.mxu0 %v1904
    %2637 = vmatpush.bf16.msra.mxu0 %v1900
    %2638 = vmatpush.bf16.msra.mxu0 %v1896
    %2639 = vmatpush.bf16.msra.mxu0 %v1892
    %2640 = vmatpush.bf16.msra.mxu0 %v1888
    %2641 = vmatmul.bf16.gmra.mxu0 %v719
    %v2642 = vpop.f32.mrf.mxu0
    %v2643 = vadd.f32 %v2630, %v2642
    %v2644 = vpop.f32.mrf.mxu0
    %2645 = vdwg.mxu0
    %2646 = vmatpush.bf16.msra.mxu0 %v1948
    %2647 = vmatpush.bf16.msra.mxu0 %v1944
    %2648 = vmatpush.bf16.msra.mxu0 %v1940
    %2649 = vmatpush.bf16.msra.mxu0 %v1936
    %2650 = vmatpush.bf16.msra.mxu0 %v1932
    %2651 = vmatpush.bf16.msra.mxu0 %v1928
    %2652 = vmatpush.bf16.msra.mxu0 %v1924
    %2653 = vmatpush.bf16.msra.mxu0 %v1920
    %2654 = vmatmul.bf16.gmra.mxu0 %v720
    %v2655 = vpop.f32.mrf.mxu0
    %v2656 = vadd.f32 %v2643, %v2655
    %v2657 = vpop.f32.mrf.mxu0
    %2658 = vdwg.mxu0
    %2659 = vmatpush.bf16.msra.mxu0 %v1980
    %2660 = vmatpush.bf16.msra.mxu0 %v1976
    %2661 = vmatpush.bf16.msra.mxu0 %v1972
    %2662 = vmatpush.bf16.msra.mxu0 %v1968
    %2663 = vmatpush.bf16.msra.mxu0 %v1964
    %2664 = vmatpush.bf16.msra.mxu0 %v1960
    %2665 = vmatpush.bf16.msra.mxu0 %v1956
    %2666 = vmatpush.bf16.msra.mxu0 %v1952
    %2667 = vmatmul.bf16.gmra.mxu0 %v721
    %v2668 = vpop.f32.mrf.mxu0
    %v2669 = vadd.f32 %v2656, %v2668
    %v2670 = vpop.f32.mrf.mxu0
    %2671 = vdwg.mxu0
    %2672 = vmatpush.bf16.msra.mxu0 %v2012
    %2673 = vmatpush.bf16.msra.mxu0 %v2008
    %2674 = vmatpush.bf16.msra.mxu0 %v2004
    %2675 = vmatpush.bf16.msra.mxu0 %v2000
    %2676 = vmatpush.bf16.msra.mxu0 %v1996
    %2677 = vmatpush.bf16.msra.mxu0 %v1992
    %2678 = vmatpush.bf16.msra.mxu0 %v1988
    %2679 = vmatpush.bf16.msra.mxu0 %v1984
    %2680 = vmatmul.bf16.gmra.mxu0 %v722
    %v2681 = vpop.f32.mrf.mxu0
    %v2682 = vadd.f32 %v2669, %v2681
    %v2683 = vpop.f32.mrf.mxu0
    %2684 = vdwg.mxu0
    %v2685 = vmax.f32 %v2370, 0.0
    %v2686 = vmax.f32 %v2474, 0.0
    %v2687 = vmax.f32 %v2578, 0.0
    %v2688 = vmax.f32 %v2682, 0.0
    %v2689 = vrot.slane %v2685, 4
    %v2690 = vadd.f32 %v2685, %v2689
    %v2691 = vrot.slane %v2690, 2
    %v2692 = vadd.f32 %v2690, %v2691
    %v2693 = vrot.slane %v2692, 1
    %v2694 = vadd.f32 %v2692, %v2693
    %v2695 = vrot.slane %v2686, 4
    %v2696 = vadd.f32 %v2686, %v2695
    %v2697 = vrot.slane %v2696, 2
    %v2698 = vadd.f32 %v2696, %v2697
    %v2699 = vrot.slane %v2698, 1
    %v2700 = vadd.f32 %v2698, %v2699
    %v2701 = vrot.slane %v2687, 4
    %v2702 = vadd.f32 %v2687, %v2701
    %v2703 = vrot.slane %v2702, 2
    %v2704 = vadd.f32 %v2702, %v2703
    %v2705 = vrot.slane %v2704, 1
    %v2706 = vadd.f32 %v2704, %v2705
    %v2707 = vrot.slane %v2688, 4
    %v2708 = vadd.f32 %v2688, %v2707
    %v2709 = vrot.slane %v2708, 2
    %v2710 = vadd.f32 %v2708, %v2709
    %v2711 = vrot.slane %v2710, 1
    %v2712 = vadd.f32 %v2710, %v2711
    %v2713 = vmul.f32 %v2685, %v2685
    %v2714 = vmul.f32 %v2686, %v2686
    %v2715 = vmul.f32 %v2687, %v2687
    %v2716 = vmul.f32 %v2688, %v2688
    %v2717 = vrot.slane %v2713, 4
    %v2718 = vadd.f32 %v2713, %v2717
    %v2719 = vrot.slane %v2718, 2
    %v2720 = vadd.f32 %v2718, %v2719
    %v2721 = vrot.slane %v2720, 1
    %v2722 = vadd.f32 %v2720, %v2721
    %v2723 = vrot.slane %v2714, 4
    %v2724 = vadd.f32 %v2714, %v2723
    %v2725 = vrot.slane %v2724, 2
    %v2726 = vadd.f32 %v2724, %v2725
    %v2727 = vrot.slane %v2726, 1
    %v2728 = vadd.f32 %v2726, %v2727
    %v2729 = vrot.slane %v2715, 4
    %v2730 = vadd.f32 %v2715, %v2729
    %v2731 = vrot.slane %v2730, 2
    %v2732 = vadd.f32 %v2730, %v2731
    %v2733 = vrot.slane %v2732, 1
    %v2734 = vadd.f32 %v2732, %v2733
    %v2735 = vrot.slane %v2716, 4
    %v2736 = vadd.f32 %v2716, %v2735
    %v2737 = vrot.slane %v2736, 2
    %v2738 = vadd.f32 %v2736, %v2737
    %v2739 = vrot.slane %v2738, 1
    %v2740 = vadd.f32 %v2738, %v2739
    %v2741 = vmul.f32 %v2694, 0.125
    %v2742 = vmul.f32 %v2700, 0.125
    %v2743 = vmul.f32 %v2706, 0.125
    %v2744 = vmul.f32 %v2712, 0.125
    %v2745 = vmul.f32 %v2722, 0.125
    %v2746 = vmul.f32 %v2728, 0.125
    %v2747 = vmul.f32 %v2734, 0.125
    %v2748 = vmul.f32 %v2740, 0.125
    %v2749 = vmul.f32 %v2741, %v2741
    %v2750 = vmul.f32 %v2742, %v2742
    %v2751 = vmul.f32 %v2743, %v2743
    %v2752 = vmul.f32 %v2744, %v2744
    %v2753 = vsub.f32 %v2745, %v2749
    %v2754 = vsub.f32 %v2746, %v2750
    %v2755 = vsub.f32 %v2747, %v2751
    %v2756 = vsub.f32 %v2748, %v2752
    %v2757 = vmax.f32 %v2753, 0.0
    %v2758 = vmax.f32 %v2754, 0.0
    %v2759 = vmax.f32 %v2755, 0.0
    %v2760 = vmax.f32 %v2756, 0.0
    %v2761 = vld [vmem:[%s7] sm:$0xf]
    %v2762 = vsub.f32 %v2685, %v2741
    %v2763 = vsub.f32 %v2686, %v2742
    %v2764 = vsub.f32 %v2687, %v2743
    %v2765 = vsub.f32 %v2688, %v2744
    %v2767 = vperm.slane %v2761, 0
    %v2768 = vperm.slane %v2761, 1
    %v2769 = vperm.slane %v2761, 2
    %v2770 = vperm.slane %v2761, 3
    %v2775 = vmul.f32 %v2767, %v2762
    %v2776 = vmul.f32 %v2768, %v2763
    %v2777 = vmul.f32 %v2769, %v2764
    %v2778 = vmul.f32 %v2770, %v2765
    %v2779 = vadd.f32 %v2757, 1e-05
    %v2780 = vadd.f32 %v2758, 1e-05
    %v2781 = vadd.f32 %v2759, 1e-05
    %v2782 = vadd.f32 %v2760, 1e-05
    %v2783 = vrsqrt.pop %v2779
    %v2784 = vmul.f32 %v2783, %v2779
    %v2785 = vmul.f32 %v2784, %v2783
    %v2786 = vmul.f32 0.5, %v2785
    %v2787 = vsub.f32 1.5, %v2786
    %v2788 = vmul.f32 %v2783, %v2787
    %vm2789 = vweird.f32 %v2779
    %vm2790 = vweird.f32 %v2783
    %vm2791 = vmor %vm2789, %vm2790
    %v2792 = vsel %vm2791, %v2783, %v2788
    %v2793 = vrsqrt.pop %v2780
    %v2794 = vmul.f32 %v2793, %v2780
    %v2795 = vmul.f32 %v2794, %v2793
    %v2796 = vmul.f32 0.5, %v2795
    %v2797 = vsub.f32 1.5, %v2796
    %v2798 = vmul.f32 %v2793, %v2797
    %vm2799 = vweird.f32 %v2780
    %vm2800 = vweird.f32 %v2793
    %vm2801 = vmor %vm2799, %vm2800
    %v2802 = vsel %vm2801, %v2793, %v2798
    %v2803 = vrsqrt.pop %v2781
    %v2804 = vmul.f32 %v2803, %v2781
    %v2805 = vmul.f32 %v2804, %v2803
    %v2806 = vmul.f32 0.5, %v2805
    %v2807 = vsub.f32 1.5, %v2806
    %v2808 = vmul.f32 %v2803, %v2807
    %vm2809 = vweird.f32 %v2781
    %vm2810 = vweird.f32 %v2803
    %vm2811 = vmor %vm2809, %vm2810
    %v2812 = vsel %vm2811, %v2803, %v2808
    %v2813 = vrsqrt.pop %v2782
    %v2814 = vmul.f32 %v2813, %v2782
    %v2815 = vmul.f32 %v2814, %v2813
    %v2816 = vmul.f32 0.5, %v2815
    %v2817 = vsub.f32 1.5, %v2816
    %v2818 = vmul.f32 %v2813, %v2817
    %vm2819 = vweird.f32 %v2782
    %vm2820 = vweird.f32 %v2813
    %vm2821 = vmor %vm2819, %vm2820
    %v2822 = vsel %vm2821, %v2813, %v2818
    %v2823 = vmul.f32 %v2775, %v2792
    %v2824 = vmul.f32 %v2776, %v2802
    %v2825 = vmul.f32 %v2777, %v2812
    %v2826 = vmul.f32 %v2778, %v2822
    %v2827 = vld [vmem:[#allocation14] sm:$0xf]
    %v2829 = vperm.slane %v2827, 0
    %v2830 = vperm.slane %v2827, 1
    %v2831 = vperm.slane %v2827, 2
    %v2832 = vperm.slane %v2827, 3
    %v2837 = vadd.f32 %v2823, %v2829
    %v2838 = vadd.f32 %v2824, %v2830
    %v2839 = vadd.f32 %v2825, %v2831
    %v2840 = vadd.f32 %v2826, %v2832
    %v2841 = vpack.c.bf16 %v2837, %v2837
    %v2842 = vpack.c.bf16 %v2838, %v2838
    %v2843 = vpack.c.bf16 %v2839, %v2839
    %v2844 = vpack.c.bf16 %v2840, %v2840
    %v2845 = vld [vmem:[#allocation15] sm:$0xf]
    %v2846 = vld [vmem:[#allocation15 + $0x4] sm:$0xf]
    %v2847 = vld [vmem:[#allocation15 + $0x8] sm:$0xf]
    %v2848 = vld [vmem:[#allocation15 + $0xc] sm:$0xf]
    %v2849 = vld [vmem:[#allocation15 + $0x10] sm:$0xf]
    %v2850 = vld [vmem:[#allocation15 + $0x14] sm:$0xf]
    %v2851 = vld [vmem:[#allocation15 + $0x18] sm:$0xf]
    %v2852 = vld [vmem:[#allocation15 + $0x1c] sm:$0xf]
    %v2853 = vld [vmem:[#allocation15 + $0x20] sm:$0xf]
    %v2854 = vld [vmem:[#allocation15 + $0x24] sm:$0xf]
    %v2855 = vld [vmem:[#allocation15 + $0x28] sm:$0xf]
    %v2856 = vld [vmem:[#allocation15 + $0x2c] sm:$0xf]
    %v2857 = vld [vmem:[#allocation15 + $0x30] sm:$0xf]
    %v2858 = vld [vmem:[#allocation15 + $0x34] sm:$0xf]
    %v2859 = vld [vmem:[#allocation15 + $0x38] sm:$0xf]
    %v2860 = vld [vmem:[#allocation15 + $0x3c] sm:$0xf]
    %v2861 = vld [vmem:[#allocation15 + $0x40] sm:$0xf]
    %v2862 = vld [vmem:[#allocation15 + $0x44] sm:$0xf]
    %v2863 = vld [vmem:[#allocation15 + $0x48] sm:$0xf]
    %v2864 = vld [vmem:[#allocation15 + $0x4c] sm:$0xf]
    %v2865 = vld [vmem:[#allocation15 + $0x50] sm:$0xf]
    %v2866 = vld [vmem:[#allocation15 + $0x54] sm:$0xf]
    %v2867 = vld [vmem:[#allocation15 + $0x58] sm:$0xf]
    %v2868 = vld [vmem:[#allocation15 + $0x5c] sm:$0xf]
    %v2869 = vld [vmem:[#allocation15 + $0x60] sm:$0xf]
    %v2870 = vld [vmem:[#allocation15 + $0x64] sm:$0xf]
    %v2871 = vld [vmem:[#allocation15 + $0x68] sm:$0xf]
    %v2872 = vld [vmem:[#allocation15 + $0x6c] sm:$0xf]
    %v2873 = vld [vmem:[#allocation15 + $0x70] sm:$0xf]
    %v2874 = vld [vmem:[#allocation15 + $0x74] sm:$0xf]
    %v2875 = vld [vmem:[#allocation15 + $0x78] sm:$0xf]
    %v2876 = vld [vmem:[#allocation15 + $0x7c] sm:$0xf]
    %v2877 = vld [vmem:[#allocation15 + $0x80] sm:$0xf]
    %v2878 = vld [vmem:[#allocation15 + $0x84] sm:$0xf]
    %v2879 = vld [vmem:[#allocation15 + $0x88] sm:$0xf]
    %v2880 = vld [vmem:[#allocation15 + $0x8c] sm:$0xf]
    %v2881 = vld [vmem:[#allocation15 + $0x90] sm:$0xf]
    %v2882 = vld [vmem:[#allocation15 + $0x94] sm:$0xf]
    %v2883 = vld [vmem:[#allocation15 + $0x98] sm:$0xf]
    %v2884 = vld [vmem:[#allocation15 + $0x9c] sm:$0xf]
    %v2885 = vld [vmem:[#allocation15 + $0xa0] sm:$0xf]
    %v2886 = vld [vmem:[#allocation15 + $0xa4] sm:$0xf]
    %v2887 = vld [vmem:[#allocation15 + $0xa8] sm:$0xf]
    %v2888 = vld [vmem:[#allocation15 + $0xac] sm:$0xf]
    %v2889 = vld [vmem:[#allocation15 + $0xb0] sm:$0xf]
    %v2890 = vld [vmem:[#allocation15 + $0xb4] sm:$0xf]
    %v2891 = vld [vmem:[#allocation15 + $0xb8] sm:$0xf]
    %v2892 = vld [vmem:[#allocation15 + $0xbc] sm:$0xf]
    %v2893 = vld [vmem:[#allocation15 + $0xc0] sm:$0xf]
    %v2894 = vld [vmem:[#allocation15 + $0xc4] sm:$0xf]
    %v2895 = vld [vmem:[#allocation15 + $0xc8] sm:$0xf]
    %v2896 = vld [vmem:[#allocation15 + $0xcc] sm:$0xf]
    %v2897 = vld [vmem:[#allocation15 + $0xd0] sm:$0xf]
    %v2898 = vld [vmem:[#allocation15 + $0xd4] sm:$0xf]
    %v2899 = vld [vmem:[#allocation15 + $0xd8] sm:$0xf]
    %v2900 = vld [vmem:[#allocation15 + $0xdc] sm:$0xf]
    %v2901 = vld [vmem:[#allocation15 + $0xe0] sm:$0xf]
    %v2902 = vld [vmem:[#allocation15 + $0xe4] sm:$0xf]
    %v2903 = vld [vmem:[#allocation15 + $0xe8] sm:$0xf]
    %v2904 = vld [vmem:[#allocation15 + $0xec] sm:$0xf]
    %v2905 = vld [vmem:[#allocation15 + $0xf0] sm:$0xf]
    %v2906 = vld [vmem:[#allocation15 + $0xf4] sm:$0xf]
    %v2907 = vld [vmem:[#allocation15 + $0xf8] sm:$0xf]
    %v2908 = vld [vmem:[#allocation15 + $0xfc] sm:$0xf]
    %v2909 = vld [vmem:[%s10] sm:$0x1]
    %v2911 = vperm.slane %v2909, 0
    %v2977 = vunpack.c.l.b16 %v2845
    %v2978 = vunpack.c.l.b16 %v2846
    %v2979 = vunpack.c.l.b16 %v2847
    %v2980 = vunpack.c.l.b16 %v2848
    %v2981 = vunpack.c.l.b16 %v2849
    %v2982 = vunpack.c.l.b16 %v2850
    %v2983 = vunpack.c.l.b16 %v2851
    %v2984 = vunpack.c.l.b16 %v2852
    %v2985 = vunpack.c.l.b16 %v2853
    %v2986 = vunpack.c.l.b16 %v2854
    %v2987 = vunpack.c.l.b16 %v2855
    %v2988 = vunpack.c.l.b16 %v2856
    %v2989 = vunpack.c.l.b16 %v2857
    %v2990 = vunpack.c.l.b16 %v2858
    %v2991 = vunpack.c.l.b16 %v2859
    %v2992 = vunpack.c.l.b16 %v2860
    %v2993 = vunpack.c.l.b16 %v2861
    %v2994 = vunpack.c.l.b16 %v2862
    %v2995 = vunpack.c.l.b16 %v2863
    %v2996 = vunpack.c.l.b16 %v2864
    %v2997 = vunpack.c.l.b16 %v2865
    %v2998 = vunpack.c.l.b16 %v2866
    %v2999 = vunpack.c.l.b16 %v2867
    %v3000 = vunpack.c.l.b16 %v2868
    %v3001 = vunpack.c.l.b16 %v2869
    %v3002 = vunpack.c.l.b16 %v2870
    %v3003 = vunpack.c.l.b16 %v2871
    %v3004 = vunpack.c.l.b16 %v2872
    %v3005 = vunpack.c.l.b16 %v2873
    %v3006 = vunpack.c.l.b16 %v2874
    %v3007 = vunpack.c.l.b16 %v2875
    %v3008 = vunpack.c.l.b16 %v2876
    %v3009 = vunpack.c.l.b16 %v2877
    %v3010 = vunpack.c.l.b16 %v2878
    %v3011 = vunpack.c.l.b16 %v2879
    %v3012 = vunpack.c.l.b16 %v2880
    %v3013 = vunpack.c.l.b16 %v2881
    %v3014 = vunpack.c.l.b16 %v2882
    %v3015 = vunpack.c.l.b16 %v2883
    %v3016 = vunpack.c.l.b16 %v2884
    %v3017 = vunpack.c.l.b16 %v2885
    %v3018 = vunpack.c.l.b16 %v2886
    %v3019 = vunpack.c.l.b16 %v2887
    %v3020 = vunpack.c.l.b16 %v2888
    %v3021 = vunpack.c.l.b16 %v2889
    %v3022 = vunpack.c.l.b16 %v2890
    %v3023 = vunpack.c.l.b16 %v2891
    %v3024 = vunpack.c.l.b16 %v2892
    %v3025 = vunpack.c.l.b16 %v2893
    %v3026 = vunpack.c.l.b16 %v2894
    %v3027 = vunpack.c.l.b16 %v2895
    %v3028 = vunpack.c.l.b16 %v2896
    %v3029 = vunpack.c.l.b16 %v2897
    %v3030 = vunpack.c.l.b16 %v2898
    %v3031 = vunpack.c.l.b16 %v2899
    %v3032 = vunpack.c.l.b16 %v2900
    %v3033 = vunpack.c.l.b16 %v2901
    %v3034 = vunpack.c.l.b16 %v2902
    %v3035 = vunpack.c.l.b16 %v2903
    %v3036 = vunpack.c.l.b16 %v2904
    %v3037 = vunpack.c.l.b16 %v2905
    %v3038 = vunpack.c.l.b16 %v2906
    %v3039 = vunpack.c.l.b16 %v2907
    %v3040 = vunpack.c.l.b16 %v2908
    %v3041 = vpack.c.b16 %v2978, %v2977
    %v3042 = vpack.c.b16 %v2980, %v2979
    %v3043 = vpack.c.b16 %v2982, %v2981
    %v3044 = vpack.c.b16 %v2984, %v2983
    %v3045 = vpack.c.b16 %v2986, %v2985
    %v3046 = vpack.c.b16 %v2988, %v2987
    %v3047 = vpack.c.b16 %v2990, %v2989
    %v3048 = vpack.c.b16 %v2992, %v2991
    %v3049 = vpack.c.b16 %v2994, %v2993
    %v3050 = vpack.c.b16 %v2996, %v2995
    %v3051 = vpack.c.b16 %v2998, %v2997
    %v3052 = vpack.c.b16 %v3000, %v2999
    %v3053 = vpack.c.b16 %v3002, %v3001
    %v3054 = vpack.c.b16 %v3004, %v3003
    %v3055 = vpack.c.b16 %v3006, %v3005
    %v3056 = vpack.c.b16 %v3008, %v3007
    %v3057 = vpack.c.b16 %v3010, %v3009
    %v3058 = vpack.c.b16 %v3012, %v3011
    %v3059 = vpack.c.b16 %v3014, %v3013
    %v3060 = vpack.c.b16 %v3016, %v3015
    %v3061 = vpack.c.b16 %v3018, %v3017
    %v3062 = vpack.c.b16 %v3020, %v3019
    %v3063 = vpack.c.b16 %v3022, %v3021
    %v3064 = vpack.c.b16 %v3024, %v3023
    %v3065 = vpack.c.b16 %v3026, %v3025
    %v3066 = vpack.c.b16 %v3028, %v3027
    %v3067 = vpack.c.b16 %v3030, %v3029
    %v3068 = vpack.c.b16 %v3032, %v3031
    %v3069 = vpack.c.b16 %v3034, %v3033
    %v3070 = vpack.c.b16 %v3036, %v3035
    %v3071 = vpack.c.b16 %v3038, %v3037
    %v3072 = vpack.c.b16 %v3040, %v3039
    %3105 = vmatpush.bf16.msra.mxu0 %v3048
    %3106 = vmatpush.bf16.msra.mxu0 %v3047
    %3107 = vmatpush.bf16.msra.mxu0 %v3046
    %3108 = vmatpush.bf16.msra.mxu0 %v3045
    %3109 = vmatpush.bf16.msra.mxu0 %v3044
    %3110 = vmatpush.bf16.msra.mxu0 %v3043
    %3111 = vmatpush.bf16.msra.mxu0 %v3042
    %3112 = vmatpush.bf16.msra.mxu0 %v3041
    %3113 = vmatmul.bf16.gmra.mxu0 %v2841
    %v3114 = vpop.f32.mrf.mxu0
    %v3115 = vadd.f32 %v2911, %v3114
    %v3116 = vpop.f32.mrf.mxu0
    %3117 = vdwg.mxu0
    %3118 = vmatpush.bf16.msra.mxu0 %v3056
    %3119 = vmatpush.bf16.msra.mxu0 %v3055
    %3120 = vmatpush.bf16.msra.mxu0 %v3054
    %3121 = vmatpush.bf16.msra.mxu0 %v3053
    %3122 = vmatpush.bf16.msra.mxu0 %v3052
    %3123 = vmatpush.bf16.msra.mxu0 %v3051
    %3124 = vmatpush.bf16.msra.mxu0 %v3050
    %3125 = vmatpush.bf16.msra.mxu0 %v3049
    %3126 = vmatmul.bf16.gmra.mxu0 %v2842
    %v3127 = vpop.f32.mrf.mxu0
    %v3128 = vadd.f32 %v3115, %v3127
    %v3129 = vpop.f32.mrf.mxu0
    %3130 = vdwg.mxu0
    %3131 = vmatpush.bf16.msra.mxu0 %v3064
    %3132 = vmatpush.bf16.msra.mxu0 %v3063
    %3133 = vmatpush.bf16.msra.mxu0 %v3062
    %3134 = vmatpush.bf16.msra.mxu0 %v3061
    %3135 = vmatpush.bf16.msra.mxu0 %v3060
    %3136 = vmatpush.bf16.msra.mxu0 %v3059
    %3137 = vmatpush.bf16.msra.mxu0 %v3058
    %3138 = vmatpush.bf16.msra.mxu0 %v3057
    %3139 = vmatmul.bf16.gmra.mxu0 %v2843
    %v3140 = vpop.f32.mrf.mxu0
    %v3141 = vadd.f32 %v3128, %v3140
    %v3142 = vpop.f32.mrf.mxu0
    %3143 = vdwg.mxu0
    %3144 = vmatpush.bf16.msra.mxu0 %v3072
    %3145 = vmatpush.bf16.msra.mxu0 %v3071
    %3146 = vmatpush.bf16.msra.mxu0 %v3070
    %3147 = vmatpush.bf16.msra.mxu0 %v3069
    %3148 = vmatpush.bf16.msra.mxu0 %v3068
    %3149 = vmatpush.bf16.msra.mxu0 %v3067
    %3150 = vmatpush.bf16.msra.mxu0 %v3066
    %3151 = vmatpush.bf16.msra.mxu0 %v3065
    %3152 = vmatmul.bf16.gmra.mxu0 %v2844
    %v3153 = vpop.f32.mrf.mxu0
    %v3154 = vadd.f32 %v3141, %v3153
    %v3155 = vpop.f32.mrf.mxu0
    %3156 = vdwg.mxu0
    %s3157 = sld [smem:[#allocation2]]
    %v3158 = vmax.f32 %v3154, 0.0
    %v3159 = vmin.f32 %v3154, 0.0
    %v3160 = vstv %s3157
    %v3161 = vmul.f32 %v3160, %v3159
    %v3162 = vadd.f32 %v3158, %v3161
    %3163 = vst [vmem:[#allocation18] sm:$0xff] %v3162
    %v3164 = vpack.c.bf16 %v3162, %v3162
    %v3165 = vld [vmem:[#allocation17] sm:$0xf]
    %v3166 = vld [vmem:[#allocation17 + $0x4] sm:$0xf]
    %v3167 = vld [vmem:[#allocation17 + $0x8] sm:$0xf]
    %v3168 = vld [vmem:[#allocation17 + $0xc] sm:$0xf]
    %v3169 = vld [vmem:[#allocation17 + $0x10] sm:$0xf]
    %v3170 = vld [vmem:[#allocation17 + $0x14] sm:$0xf]
    %v3171 = vld [vmem:[#allocation17 + $0x18] sm:$0xf]
    %v3172 = vld [vmem:[#allocation17 + $0x1c] sm:$0xf]
    %v3173 = vld [vmem:[#allocation17 + $0x20] sm:$0xf]
    %v3174 = vld [vmem:[#allocation17 + $0x24] sm:$0xf]
    %v3175 = vld [vmem:[#allocation17 + $0x28] sm:$0xf]
    %v3176 = vld [vmem:[#allocation17 + $0x2c] sm:$0xf]
    %v3177 = vld [vmem:[#allocation17 + $0x30] sm:$0xf]
    %v3178 = vld [vmem:[#allocation17 + $0x34] sm:$0xf]
    %v3179 = vld [vmem:[#allocation17 + $0x38] sm:$0xf]
    %v3180 = vld [vmem:[#allocation17 + $0x3c] sm:$0xf]
    %v3181 = vld [vmem:[%s12] sm:$0x1]
    %v3183 = vperm.slane %v3181, 0
    %v3201 = vunpack.c.l.b16 %v3165
    %v3202 = vunpack.c.l.b16 %v3166
    %v3203 = vunpack.c.l.b16 %v3167
    %v3204 = vunpack.c.l.b16 %v3168
    %v3205 = vunpack.c.l.b16 %v3169
    %v3206 = vunpack.c.l.b16 %v3170
    %v3207 = vunpack.c.l.b16 %v3171
    %v3208 = vunpack.c.l.b16 %v3172
    %v3209 = vunpack.c.l.b16 %v3173
    %v3210 = vunpack.c.l.b16 %v3174
    %v3211 = vunpack.c.l.b16 %v3175
    %v3212 = vunpack.c.l.b16 %v3176
    %v3213 = vunpack.c.l.b16 %v3177
    %v3214 = vunpack.c.l.b16 %v3178
    %v3215 = vunpack.c.l.b16 %v3179
    %v3216 = vunpack.c.l.b16 %v3180
    %v3217 = vpack.c.b16 %v3202, %v3201
    %v3218 = vpack.c.b16 %v3204, %v3203
    %v3219 = vpack.c.b16 %v3206, %v3205
    %v3220 = vpack.c.b16 %v3208, %v3207
    %v3221 = vpack.c.b16 %v3210, %v3209
    %v3222 = vpack.c.b16 %v3212, %v3211
    %v3223 = vpack.c.b16 %v3214, %v3213
    %v3224 = vpack.c.b16 %v3216, %v3215
    %3233 = vmatpush.bf16.msra.mxu0 %v3224
    %3234 = vmatpush.bf16.msra.mxu0 %v3223
    %3235 = vmatpush.bf16.msra.mxu0 %v3222
    %3236 = vmatpush.bf16.msra.mxu0 %v3221
    %3237 = vmatpush.bf16.msra.mxu0 %v3220
    %3238 = vmatpush.bf16.msra.mxu0 %v3219
    %3239 = vmatpush.bf16.msra.mxu0 %v3218
    %3240 = vmatpush.bf16.msra.mxu0 %v3217
    %3241 = vmatmul.bf16.gmra.mxu0 %v3164
    %v3242 = vpop.f32.mrf.mxu0
    %v3243 = vadd.f32 %v3183, %v3242
    %v3244 = vpop.f32.mrf.mxu0
    %3245 = vdwg.mxu0
    %3246 = vst [vmem:[#allocation19] sm:$0xff] %v3243
    // Predicated region
    $region94: #{tpu_custom_call.1} parent=1 // pred_check
      _
    $region95: #{tpu_custom_call.1} parent=1 // pred_check_branch
      %3248 = sbr.rel (0) target = $region97
    $region96: #{tpu_custom_call.1} parent=1 // pred_region
      %3250 = vsyncadd [#allocation5], 0
      %s3252 = sshll.u32 [#allocation18], 4
      %s3253 = int_to_ptr.vmem [resolvable:$true] %s3252
      %s3254 = sshll.u32 %s14, 4
      %s3255 = int_to_ptr.hbm [resolvable:$true] %s3254
      %3257 = dma.vmem_to_hbm [thread:$0]  %s3253, 128, %s3255, [#allocation5]
    $region97: #{tpu_custom_call.1} parent=1 // pred_fallthru
      _
    // Predicated region
    $region98: #{tpu_custom_call.1} parent=1 // pred_check
      _
    $region99: #{tpu_custom_call.1} parent=1 // pred_check_branch
      %3259 = sbr.rel (0) target = $region101
    $region100: #{tpu_custom_call.1} parent=1 // pred_region
      %3261 = vsyncadd [#allocation20], 0
      %s3263 = sshll.u32 [#allocation19], 4
      %s3264 = int_to_ptr.vmem [resolvable:$true] %s3263
      %s3265 = sshll.u32 %s15, 4
      %s3266 = int_to_ptr.hbm [resolvable:$true] %s3265
      %3268 = dma.vmem_to_hbm [thread:$0]  %s3264, 128, %s3266, [#allocation20]
    $region101: #{tpu_custom_call.1} parent=1 // pred_fallthru
      _
    // Predicated region
    $region102: #{tpu_custom_call.1} parent=1 // pred_check
      _
    $region103: #{tpu_custom_call.1} parent=1 // pred_check_branch
      %3270 = sbr.rel (0) target = $region105
    $region104: #{tpu_custom_call.1} parent=1 // pred_region
      %3272 = dma.done [#allocation5], 128
    $region105: #{tpu_custom_call.1} parent=1 // pred_fallthru
      _
    // Predicated region
    $region106: #{tpu_custom_call.1} parent=1 // pred_check
      _
    $region107: #{tpu_custom_call.1} parent=1 // pred_check_branch
      %3274 = sbr.rel (0) target = $region109
    $region108: #{tpu_custom_call.1} parent=1 // pred_region
      %3276 = dma.done [#allocation20], 128
    $region109: #{tpu_custom_call.1} parent=1 // pred_fallthru
      _
    %3277 = vsyncpa [#allocation4], 1
    %3278 = vsyncpa [#allocation7], 1
    %3279 = vsyncpa [#allocation10], 1
    %3280 = vsyncpa [#allocation13], 1
    %3281 = vsyncpa [#allocation16], 1
    %3282 = vsyncpa [#allocation5], 1
    %3283 = vsyncpa [#allocation20], 1

</llo_original>
